<compile_context>
chip_gen: v5e
topology: v5e:2x2
jax: 0.10.0
libtpu: 0.0.40
codegen_flags: <defaults>
</compile_context>

<pallas_src>
import functools
import math

import jax
import jax.numpy as jnp
from jax.experimental import pallas as pl
from jax.experimental.pallas import tpu as pltpu

EPS = 1e-5

# kernel argument order for per-layer params
PARAM_ORDER = (
    "ln1_g", "ln1_b",
    "wq", "bq", "wk", "bk", "wv", "bv", "wo", "bo",
    "ln2_g", "ln2_b",
    "w1", "b1", "w2", "b2",
)


def _layernorm(x, g, b):
    mu = jnp.mean(x, axis=-1, keepdims=True)
    var = jnp.mean((x - mu) ** 2, axis=-1, keepdims=True)
    return (x - mu) * jax.lax.rsqrt(var + EPS) * g + b


def fused_slot_attention_kernel(
        x_ref,
        ln1_g_ref, ln1_b_ref,
        wq_ref, bq_ref, wk_ref, bk_ref, wv_ref, bv_ref, wo_ref, bo_ref,
        ln2_g_ref, ln2_b_ref,
        w1_ref, b1_ref, w2_ref, b2_ref,
        fin_g_ref, fin_b_ref,
        out_ref, x_scr,
        *, num_heads, matmul_dtype):
    """One grid step == one encoder layer; residual stream lives in VMEM."""
    l = pl.program_id(0)

    @pl.when(l == 0)
    def _():
        x_scr[...] = x_ref[...].astype(jnp.float32)

    x = x_scr[...]                           # (B, S, D) f32 residual stream
    B, S, D = x.shape
    dk = D // num_heads
    scale = 1.0 / math.sqrt(dk)

    def mm(a, b):                            # MXU matmul, f32 accumulation
        return jnp.dot(a.astype(matmul_dtype), b.astype(matmul_dtype),
                       preferred_element_type=jnp.float32)

    # ---- sublayer 1: x + MHSA(LayerNorm(x)) ----
    xn = _layernorm(x, ln1_g_ref[0], ln1_b_ref[0]).reshape(B * S, D)
    q = mm(xn, wq_ref[0]) + bq_ref[0]        # (B*S, D)
    k = mm(xn, wk_ref[0]) + bk_ref[0]
    v = mm(xn, wv_ref[0]) + bv_ref[0]

    wo = wo_ref[0]                           # (D, D)
    attn = jnp.zeros((B * S, D), jnp.float32)
    for h in range(num_heads):               # static, unrolled over heads
        sl = slice(h * dk, (h + 1) * dk)
        qh = q[:, sl].reshape(B, S, dk)
        kh = k[:, sl].reshape(B, S, dk)
        vh = v[:, sl].reshape(B, S, dk)
        s = jnp.einsum("bqd,bkd->bqk",
                       qh.astype(matmul_dtype), kh.astype(matmul_dtype),
                       preferred_element_type=jnp.float32) * scale   # (B,S,S)
        s = s - jnp.max(s, axis=-1, keepdims=True)
        p = jnp.exp(s)
        denom = jnp.sum(p, axis=-1, keepdims=True)                   # (B,S,1)
        oh = jnp.einsum("bqk,bkd->bqd",
                        p.astype(matmul_dtype), vh.astype(matmul_dtype),
                        preferred_element_type=jnp.float32)          # (B,S,dk)
        # normalize after PV (identical math); reciprocal runs on the EUP slot
        oh = oh * pl.reciprocal(denom, approx=True)
        # output projection accumulated per head — no jnp.concatenate
        attn = attn + mm(oh.reshape(B * S, dk), wo[sl, :])
    x = x + (attn + bo_ref[0]).reshape(B, S, D)   # dropout == identity (eval)

    # ---- sublayer 2: x + FFN(LayerNorm(x)) ----
    xn2 = _layernorm(x, ln2_g_ref[0], ln2_b_ref[0]).reshape(B * S, D)
    hdn = jnp.maximum(mm(xn2, w1_ref[0]) + b1_ref[0], 0.0)
    ffn = mm(hdn, w2_ref[0]) + b2_ref[0]
    x = x + ffn.reshape(B, S, D)

    x_scr[...] = x

    @pl.when(l == pl.num_programs(0) - 1)
    def _():
        out_ref[...] = _layernorm(
            x, fin_g_ref[...], fin_b_ref[...]).astype(out_ref.dtype)


def slot_self_attention(x, layer_params, final_g, final_b, num_heads,
                        matmul_dtype=jnp.float32):
    """Fused forward: all layers + final LayerNorm in one pallas_call."""
    B, S, D = x.shape
    L = len(layer_params)
    F = layer_params[0]["w1"].shape[1]

    # Stack per-layer params along a leading L axis; streamed over the grid.
    stacked = {name: jnp.stack([p[name] for p in layer_params], axis=0)
               for name in PARAM_ORDER}

    def layer_spec(shape):   # (L, ...) array, one layer-slice per grid step
        n = len(shape) - 1
        return pl.BlockSpec((1,) + tuple(shape[1:]),
                            lambda l, _n=n: (l,) + (0,) * _n)

    def const_spec(shape):   # resident across all layer steps (DMA'd once)
        n = len(shape)
        return pl.BlockSpec(tuple(shape), lambda l, _n=n: (0,) * _n)

    # Advisory cost estimate (per-layer matmuls + attention + FFN, exp count).
    flops = L * (8 * B * S * D * D + 4 * B * S * S * D + 4 * B * S * D * F)
    transcendentals = L * num_heads * B * S * S
    param_bytes = sum(int(v.size) * v.dtype.itemsize for v in stacked.values())
    param_bytes += int(final_g.size) * final_g.dtype.itemsize
    param_bytes += int(final_b.size) * final_b.dtype.itemsize
    bytes_accessed = int(2 * B * S * D * x.dtype.itemsize) + param_bytes

    kernel = functools.partial(fused_slot_attention_kernel,
                               num_heads=num_heads, matmul_dtype=matmul_dtype)

    grid_spec = pltpu.PrefetchScalarGridSpec(
        num_scalar_prefetch=0,
        grid=(L,),
        in_specs=([const_spec((B, S, D))]
                  + [layer_spec(stacked[name].shape) for name in PARAM_ORDER]
                  + [const_spec(final_g.shape), const_spec(final_b.shape)]),
        out_specs=pl.BlockSpec((B, S, D), lambda l: (0, 0, 0)),
        scratch_shapes=[pltpu.VMEM((B, S, D), jnp.float32)],
    )

    return pl.pallas_call(
        kernel,
        out_shape=jax.ShapeDtypeStruct((B, S, D), x.dtype),
        grid_spec=grid_spec,
        compiler_params=pltpu.CompilerParams(
            dimension_semantics=("arbitrary",)),   # layer axis is sequential
        cost_estimate=pl.CostEstimate(flops=flops,
                                      transcendentals=transcendentals,
                                      bytes_accessed=bytes_accessed),
    )(x, *[stacked[name] for name in PARAM_ORDER], final_g, final_b)


# ------------------------- parameter construction -------------------------

def _linear_init(key, fan_in, fan_out):
    # PyTorch nn.Linear default init: U(-1/sqrt(fan_in), +1/sqrt(fan_in))
    kw, kb = jax.random.split(key)
    bound = 1.0 / math.sqrt(fan_in)
    w = jax.random.uniform(kw, (fan_in, fan_out), jnp.float32, -bound, bound)
    b = jax.random.uniform(kb, (1, fan_out), jnp.float32, -bound, bound)
    return w, b


def make_params(key, d_model, d_ff, num_layers):
    layer_params = []
    for i in range(num_layers):
        k = jax.random.fold_in(key, i)
        kq, kk, kv, ko, k1, k2 = jax.random.split(k, 6)
        wq, bq = _linear_init(kq, d_model, d_model)
        wk, bk = _linear_init(kk, d_model, d_model)
        wv, bv = _linear_init(kv, d_model, d_model)
        wo, bo = _linear_init(ko, d_model, d_model)
        w1, b1 = _linear_init(k1, d_model, d_ff)
        w2, b2 = _linear_init(k2, d_ff, d_model)
        layer_params.append(dict(
            ln1_g=jnp.ones((1, d_model), jnp.float32),
            ln1_b=jnp.zeros((1, d_model), jnp.float32),
            wq=wq, bq=bq, wk=wk, bk=bk, wv=wv, bv=bv, wo=wo, bo=bo,
            ln2_g=jnp.ones((1, d_model), jnp.float32),
            ln2_b=jnp.zeros((1, d_model), jnp.float32),
            w1=w1, b1=b1, w2=w2, b2=b2,
        ))
    final_g = jnp.ones((1, d_model), jnp.float32)
    final_b = jnp.zeros((1, d_model), jnp.float32)
    return layer_params, final_g, final_b


# ------------------------- pure-JAX reference -------------------------

def _ref_layernorm(x, g, b):
    mu = jnp.mean(x, axis=-1, keepdims=True)
    var = jnp.mean((x - mu) ** 2, axis=-1, keepdims=True)
    return (x - mu) / jnp.sqrt(var + EPS) * g + b


def _ref_forward(x, layer_params, final_g, final_b, num_heads):
    B, S, D = x.shape
    dk = D // num_heads
    for p in layer_params:
        xn = _ref_layernorm(x, p["ln1_g"], p["ln1_b"])
        q = xn @ p["wq"] + p["bq"]
        k = xn @ p["wk"] + p["bk"]
        v = xn @ p["wv"] + p["bv"]
        q = q.reshape(B, S, num_heads, dk).transpose(0, 2, 1, 3)
        k = k.reshape(B, S, num_heads, dk).transpose(0, 2, 1, 3)
        v = v.reshape(B, S, num_heads, dk).transpose(0, 2, 1, 3)
        s = jnp.einsum("bhqd,bhkd->bhqk", q, k) / math.sqrt(dk)
        a = jax.nn.softmax(s, axis=-1)
        o = jnp.einsum("bhqk,bhkd->bhqd", a, v).transpose(0, 2, 1, 3).reshape(B, S, D)
        x = x + (o @ p["wo"] + p["bo"])
        xn2 = _ref_layernorm(x, p["ln2_g"], p["ln2_b"])
        h = jnp.maximum(xn2 @ p["w1"] + p["b1"], 0.0)
        x = x + (h @ p["w2"] + p["b2"])
    return _ref_layernorm(x, final_g, final_b)


if __name__ == "__main__":
    B, S, D = 2, 8, 32            # batch, slots, hidden (= layer.size)
    NUM_HEADS = 4
    D_FF = 64
    N_LAYERS = 2

    key = jax.random.PRNGKey(0)
    kx, kp = jax.random.split(key)
    x = jax.random.normal(kx, (B, S, D), dtype=jnp.float32)
    layer_params, final_g, final_b = make_params(kp, D, D_FF, N_LAYERS)

    out = slot_self_attention(x, layer_params, final_g, final_b, NUM_HEADS)
    out = jax.block_until_ready(out)

    ref = _ref_forward(x, layer_params, final_g, final_b, NUM_HEADS)
    assert out.shape == (B, S, D)
    assert jnp.allclose(out, ref, rtol=1e-3, atol=1e-3), "mismatch vs reference"

    print("KERNEL_OK")
</pallas_src>

<mosaic_0001>
module attributes {stable_mosaic.version = 11 : i64} {
  func.func @fused_slot_attention_kernel(%arg0: i32, %arg1: memref<2x8x32xf32, #tpu.memory_space<vmem>>, %arg2: memref<1x1x32xf32, #tpu.memory_space<vmem>>, %arg3: memref<1x1x32xf32, #tpu.memory_space<vmem>>, %arg4: memref<1x32x32xf32, #tpu.memory_space<vmem>>, %arg5: memref<1x1x32xf32, #tpu.memory_space<vmem>>, %arg6: memref<1x32x32xf32, #tpu.memory_space<vmem>>, %arg7: memref<1x1x32xf32, #tpu.memory_space<vmem>>, %arg8: memref<1x32x32xf32, #tpu.memory_space<vmem>>, %arg9: memref<1x1x32xf32, #tpu.memory_space<vmem>>, %arg10: memref<1x32x32xf32, #tpu.memory_space<vmem>>, %arg11: memref<1x1x32xf32, #tpu.memory_space<vmem>>, %arg12: memref<1x1x32xf32, #tpu.memory_space<vmem>>, %arg13: memref<1x1x32xf32, #tpu.memory_space<vmem>>, %arg14: memref<1x32x64xf32, #tpu.memory_space<vmem>>, %arg15: memref<1x1x64xf32, #tpu.memory_space<vmem>>, %arg16: memref<1x64x32xf32, #tpu.memory_space<vmem>>, %arg17: memref<1x1x32xf32, #tpu.memory_space<vmem>>, %arg18: memref<1x32xf32, #tpu.memory_space<vmem>>, %arg19: memref<1x32xf32, #tpu.memory_space<vmem>>, %arg20: memref<2x8x32xf32, #tpu.memory_space<vmem>>, %arg21: memref<2x8x32xf32, #tpu.memory_space<vmem>>) attributes {dimension_semantics = [#tpu.dimension_semantics<arbitrary>], iteration_bounds = array<i64: 2>, scalar_prefetch = 0 : i64, scratch_operands = 1 : i64, tpu.core_type = #tpu.core_type<tc>, window_params = [{pipeline_mode = #tpu.pipeline_mode<synchronous>, transform_indices = @transform_0, window_bounds = array<i64: 2, 8, 32>}, {transform_indices = @transform_1, window_bounds = array<i64: 1, 1, 32>}, {transform_indices = @transform_2, window_bounds = array<i64: 1, 1, 32>}, {transform_indices = @transform_3, window_bounds = array<i64: 1, 32, 32>}, {transform_indices = @transform_4, window_bounds = array<i64: 1, 1, 32>}, {transform_indices = @transform_5, window_bounds = array<i64: 1, 32, 32>}, {transform_indices = @transform_6, window_bounds = array<i64: 1, 1, 32>}, {transform_indices = @transform_7, window_bounds = array<i64: 1, 32, 32>}, {transform_indices = @transform_8, window_bounds = array<i64: 1, 1, 32>}, {transform_indices = @transform_9, window_bounds = array<i64: 1, 32, 32>}, {transform_indices = @transform_10, window_bounds = array<i64: 1, 1, 32>}, {transform_indices = @transform_11, window_bounds = array<i64: 1, 1, 32>}, {transform_indices = @transform_12, window_bounds = array<i64: 1, 1, 32>}, {transform_indices = @transform_13, window_bounds = array<i64: 1, 32, 64>}, {transform_indices = @transform_14, window_bounds = array<i64: 1, 1, 64>}, {transform_indices = @transform_15, window_bounds = array<i64: 1, 64, 32>}, {transform_indices = @transform_16, window_bounds = array<i64: 1, 1, 32>}, {pipeline_mode = #tpu.pipeline_mode<synchronous>, transform_indices = @transform_17, window_bounds = array<i64: 1, 32>}, {pipeline_mode = #tpu.pipeline_mode<synchronous>, transform_indices = @transform_18, window_bounds = array<i64: 1, 32>}, {pipeline_mode = #tpu.pipeline_mode<synchronous>, transform_indices = @transform_19, window_bounds = array<i64: 2, 8, 32>}]} {
    %c0_i32 = arith.constant 0 : i32
    %0 = arith.cmpi eq, %arg0, %c0_i32 : i32
    %1 = arith.extui %0 : i1 to i32
    %c0_i32_0 = arith.constant 0 : i32
    %2 = arith.cmpi ne, %1, %c0_i32_0 : i32
    scf.if %2 {
      %c0_95 = arith.constant 0 : index
      %c0_96 = arith.constant 0 : index
      %c0_97 = arith.constant 0 : index
      %210 = vector.load %arg1[%c0_95, %c0_96, %c0_97] : memref<2x8x32xf32, #tpu.memory_space<vmem>>, vector<2x8x32xf32>
      %c0_98 = arith.constant 0 : index
      %c0_99 = arith.constant 0 : index
      %c0_100 = arith.constant 0 : index
      %211 = vector.load %arg21[%c0_98, %c0_99, %c0_100] : memref<2x8x32xf32, #tpu.memory_space<vmem>>, vector<2x8x32xf32>
      tpu.vector_store %arg21[%c0_98, %c0_99, %c0_100], %210 {strides = array<i32>} : memref<2x8x32xf32, #tpu.memory_space<vmem>>, vector<2x8x32xf32>,
    } else {
    }
    %c0 = arith.constant 0 : index
    %c0_1 = arith.constant 0 : index
    %c0_2 = arith.constant 0 : index
    %3 = vector.load %arg21[%c0, %c0_1, %c0_2] : memref<2x8x32xf32, #tpu.memory_space<vmem>>, vector<2x8x32xf32>
    %c0_3 = arith.constant 0 : index
    %c0_4 = arith.constant 0 : index
    %c0_5 = arith.constant 0 : index
    %4 = vector.load %arg2[%c0_3, %c0_4, %c0_5] : memref<1x1x32xf32, #tpu.memory_space<vmem>>, vector<1x1x32xf32>
    %5 = vector.shape_cast %4 : vector<1x1x32xf32> to vector<1x32xf32>
    %c0_6 = arith.constant 0 : index
    %c0_7 = arith.constant 0 : index
    %c0_8 = arith.constant 0 : index
    %6 = vector.load %arg3[%c0_6, %c0_7, %c0_8] : memref<1x1x32xf32, #tpu.memory_space<vmem>>, vector<1x1x32xf32>
    %7 = vector.shape_cast %6 : vector<1x1x32xf32> to vector<1x32xf32>
    %cst = arith.constant dense<0.000000e+00> : vector<2x8xf32>
    %8 = vector.multi_reduction <add>, %3, %cst [2] : vector<2x8x32xf32> to vector<2x8xf32>
    %9 = vector.shape_cast %8 : vector<2x8xf32> to vector<2x8x1xf32>
    %cst_9 = arith.constant 3.200000e+01 : f32
    %10 = vector.broadcast %cst_9 : f32 to vector<2x8x1xf32>
    %11 = arith.divf %9, %10 : vector<2x8x1xf32>
    %12 = vector.broadcast %11 : vector<2x8x1xf32> to vector<2x8x32xf32>
    %13 = arith.subf %3, %12 : vector<2x8x32xf32>
    %14 = arith.mulf %13, %13 : vector<2x8x32xf32>
    %cst_10 = arith.constant dense<0.000000e+00> : vector<2x8xf32>
    %15 = vector.multi_reduction <add>, %14, %cst_10 [2] : vector<2x8x32xf32> to vector<2x8xf32>
    %16 = vector.shape_cast %15 : vector<2x8xf32> to vector<2x8x1xf32>
    %cst_11 = arith.constant 3.200000e+01 : f32
    %17 = vector.broadcast %cst_11 : f32 to vector<2x8x1xf32>
    %18 = arith.divf %16, %17 : vector<2x8x1xf32>
    %19 = vector.broadcast %11 : vector<2x8x1xf32> to vector<2x8x32xf32>
    %20 = arith.subf %3, %19 : vector<2x8x32xf32>
    %cst_12 = arith.constant 9.99999974E-6 : f32
    %21 = vector.broadcast %cst_12 : f32 to vector<2x8x1xf32>
    %22 = arith.addf %18, %21 : vector<2x8x1xf32>
    %23 = math.rsqrt %22 : vector<2x8x1xf32>
    %24 = vector.broadcast %23 : vector<2x8x1xf32> to vector<2x8x32xf32>
    %25 = arith.mulf %20, %24 : vector<2x8x32xf32>
    %26 = vector.shape_cast %5 : vector<1x32xf32> to vector<1x1x32xf32>
    %27 = vector.broadcast %26 : vector<1x1x32xf32> to vector<2x8x32xf32>
    %28 = arith.mulf %25, %27 : vector<2x8x32xf32>
    %29 = vector.shape_cast %7 : vector<1x32xf32> to vector<1x1x32xf32>
    %30 = vector.broadcast %29 : vector<1x1x32xf32> to vector<2x8x32xf32>
    %31 = arith.addf %28, %30 : vector<2x8x32xf32>
    %32 = vector.shape_cast %31 : vector<2x8x32xf32> to vector<16x32xf32>
    %c0_13 = arith.constant 0 : index
    %c0_14 = arith.constant 0 : index
    %c0_15 = arith.constant 0 : index
    %33 = vector.load %arg4[%c0_13, %c0_14, %c0_15] : memref<1x32x32xf32, #tpu.memory_space<vmem>>, vector<1x32x32xf32>
    %34 = vector.shape_cast %33 : vector<1x32x32xf32> to vector<32x32xf32>
    %cst_16 = arith.constant dense<0.000000e+00> : vector<16x32xf32>
    %35 = tpu.matmul %32, %34, %cst_16 {dimension_numbers = #tpu.dot_dimension_numbers<[1], [0], [0], [1], [0, 0, 1, 1], [], []>} : vector<16x32xf32>, vector<32x32xf32>, vector<16x32xf32> -> vector<16x32xf32>
    %c0_17 = arith.constant 0 : index
    %c0_18 = arith.constant 0 : index
    %c0_19 = arith.constant 0 : index
    %36 = vector.load %arg5[%c0_17, %c0_18, %c0_19] : memref<1x1x32xf32, #tpu.memory_space<vmem>>, vector<1x1x32xf32>
    %37 = vector.shape_cast %36 : vector<1x1x32xf32> to vector<1x32xf32>
    %38 = vector.broadcast %37 : vector<1x32xf32> to vector<16x32xf32>
    %39 = arith.addf %35, %38 : vector<16x32xf32>
    %c0_20 = arith.constant 0 : index
    %c0_21 = arith.constant 0 : index
    %c0_22 = arith.constant 0 : index
    %40 = vector.load %arg6[%c0_20, %c0_21, %c0_22] : memref<1x32x32xf32, #tpu.memory_space<vmem>>, vector<1x32x32xf32>
    %41 = vector.shape_cast %40 : vector<1x32x32xf32> to vector<32x32xf32>
    %cst_23 = arith.constant dense<0.000000e+00> : vector<16x32xf32>
    %42 = tpu.matmul %32, %41, %cst_23 {dimension_numbers = #tpu.dot_dimension_numbers<[1], [0], [0], [1], [0, 0, 1, 1], [], []>} : vector<16x32xf32>, vector<32x32xf32>, vector<16x32xf32> -> vector<16x32xf32>
    %c0_24 = arith.constant 0 : index
    %c0_25 = arith.constant 0 : index
    %c0_26 = arith.constant 0 : index
    %43 = vector.load %arg7[%c0_24, %c0_25, %c0_26] : memref<1x1x32xf32, #tpu.memory_space<vmem>>, vector<1x1x32xf32>
    %44 = vector.shape_cast %43 : vector<1x1x32xf32> to vector<1x32xf32>
    %45 = vector.broadcast %44 : vector<1x32xf32> to vector<16x32xf32>
    %46 = arith.addf %42, %45 : vector<16x32xf32>
    %c0_27 = arith.constant 0 : index
    %c0_28 = arith.constant 0 : index
    %c0_29 = arith.constant 0 : index
    %47 = vector.load %arg8[%c0_27, %c0_28, %c0_29] : memref<1x32x32xf32, #tpu.memory_space<vmem>>, vector<1x32x32xf32>
    %48 = vector.shape_cast %47 : vector<1x32x32xf32> to vector<32x32xf32>
    %cst_30 = arith.constant dense<0.000000e+00> : vector<16x32xf32>
    %49 = tpu.matmul %32, %48, %cst_30 {dimension_numbers = #tpu.dot_dimension_numbers<[1], [0], [0], [1], [0, 0, 1, 1], [], []>} : vector<16x32xf32>, vector<32x32xf32>, vector<16x32xf32> -> vector<16x32xf32>
    %c0_31 = arith.constant 0 : index
    %c0_32 = arith.constant 0 : index
    %c0_33 = arith.constant 0 : index
    %50 = vector.load %arg9[%c0_31, %c0_32, %c0_33] : memref<1x1x32xf32, #tpu.memory_space<vmem>>, vector<1x1x32xf32>
    %51 = vector.shape_cast %50 : vector<1x1x32xf32> to vector<1x32xf32>
    %52 = vector.broadcast %51 : vector<1x32xf32> to vector<16x32xf32>
    %53 = arith.addf %49, %52 : vector<16x32xf32>
    %c0_34 = arith.constant 0 : index
    %c0_35 = arith.constant 0 : index
    %c0_36 = arith.constant 0 : index
    %54 = vector.load %arg10[%c0_34, %c0_35, %c0_36] : memref<1x32x32xf32, #tpu.memory_space<vmem>>, vector<1x32x32xf32>
    %55 = vector.shape_cast %54 : vector<1x32x32xf32> to vector<32x32xf32>
    %cst_37 = arith.constant 0.000000e+00 : f32
    %56 = vector.broadcast %cst_37 : f32 to vector<16x32xf32>
    %57 = vector.extract_strided_slice %39 {offsets = [0, 0], sizes = [16, 8], strides = [1, 1]} : vector<16x32xf32> to vector<16x8xf32>
    %58 = vector.shape_cast %57 : vector<16x8xf32> to vector<2x8x8xf32>
    %59 = vector.extract_strided_slice %46 {offsets = [0, 0], sizes = [16, 8], strides = [1, 1]} : vector<16x32xf32> to vector<16x8xf32>
    %60 = vector.shape_cast %59 : vector<16x8xf32> to vector<2x8x8xf32>
    %61 = vector.extract_strided_slice %53 {offsets = [0, 0], sizes = [16, 8], strides = [1, 1]} : vector<16x32xf32> to vector<16x8xf32>
    %62 = vector.shape_cast %61 : vector<16x8xf32> to vector<2x8x8xf32>
    "tpu.trace_start"() <{level = 10 : i32, message = "bqd,bkd->bqk"}> : () -> ()
    %cst_38 = arith.constant dense<0.000000e+00> : vector<2x8x8xf32>
    %63 = tpu.matmul %58, %60, %cst_38 {dimension_numbers = #tpu.dot_dimension_numbers<[2], [2], [1], [1], [0, 0, 0, 1, 1, 1], [0], [0]>} : vector<2x8x8xf32>, vector<2x8x8xf32>, vector<2x8x8xf32> -> vector<2x8x8xf32>
    "tpu.trace_stop"() : () -> ()
    %cst_39 = arith.constant 0.353553385 : f32
    %64 = vector.broadcast %cst_39 : f32 to vector<2x8x8xf32>
    %65 = arith.mulf %63, %64 : vector<2x8x8xf32>
    %cst_40 = arith.constant dense<0xFF800000> : vector<2x8xf32>
    %66 = vector.multi_reduction <maximumf>, %65, %cst_40 [2] : vector<2x8x8xf32> to vector<2x8xf32>
    %67 = vector.shape_cast %66 : vector<2x8xf32> to vector<2x8x1xf32>
    %68 = vector.broadcast %67 : vector<2x8x1xf32> to vector<2x8x8xf32>
    %69 = arith.subf %65, %68 : vector<2x8x8xf32>
    %70 = math.exp %69 : vector<2x8x8xf32>
    %cst_41 = arith.constant dense<0.000000e+00> : vector<2x8xf32>
    %71 = vector.multi_reduction <add>, %70, %cst_41 [2] : vector<2x8x8xf32> to vector<2x8xf32>
    %72 = vector.shape_cast %71 : vector<2x8xf32> to vector<2x8x1xf32>
    "tpu.trace_start"() <{level = 10 : i32, message = "bqk,bkd->bqd"}> : () -> ()
    %cst_42 = arith.constant dense<0.000000e+00> : vector<2x8x8xf32>
    %73 = tpu.matmul %70, %62, %cst_42 {dimension_numbers = #tpu.dot_dimension_numbers<[2], [1], [1], [2], [0, 0, 0, 1, 1, 2], [0], [0]>} : vector<2x8x8xf32>, vector<2x8x8xf32>, vector<2x8x8xf32> -> vector<2x8x8xf32>
    "tpu.trace_stop"() : () -> ()
    %74 = tpu.reciprocal %72 {approx = true} : vector<2x8x1xf32> -> vector<2x8x1xf32>
    %75 = vector.broadcast %74 : vector<2x8x1xf32> to vector<2x8x8xf32>
    %76 = arith.mulf %73, %75 : vector<2x8x8xf32>
    %77 = vector.shape_cast %76 : vector<2x8x8xf32> to vector<16x8xf32>
    %78 = vector.extract_strided_slice %55 {offsets = [0, 0], sizes = [8, 32], strides = [1, 1]} : vector<32x32xf32> to vector<8x32xf32>
    %cst_43 = arith.constant dense<0.000000e+00> : vector<16x32xf32>
    %79 = tpu.matmul %77, %78, %cst_43 {dimension_numbers = #tpu.dot_dimension_numbers<[1], [0], [0], [1], [0, 0, 1, 1], [], []>} : vector<16x8xf32>, vector<8x32xf32>, vector<16x32xf32> -> vector<16x32xf32>
    %80 = arith.addf %56, %79 : vector<16x32xf32>
    %81 = vector.extract_strided_slice %39 {offsets = [0, 8], sizes = [16, 8], strides = [1, 1]} : vector<16x32xf32> to vector<16x8xf32>
    %82 = vector.shape_cast %81 : vector<16x8xf32> to vector<2x8x8xf32>
    %83 = vector.extract_strided_slice %46 {offsets = [0, 8], sizes = [16, 8], strides = [1, 1]} : vector<16x32xf32> to vector<16x8xf32>
    %84 = vector.shape_cast %83 : vector<16x8xf32> to vector<2x8x8xf32>
    %85 = vector.extract_strided_slice %53 {offsets = [0, 8], sizes = [16, 8], strides = [1, 1]} : vector<16x32xf32> to vector<16x8xf32>
    %86 = vector.shape_cast %85 : vector<16x8xf32> to vector<2x8x8xf32>
    "tpu.trace_start"() <{level = 10 : i32, message = "bqd,bkd->bqk"}> : () -> ()
    %cst_44 = arith.constant dense<0.000000e+00> : vector<2x8x8xf32>
    %87 = tpu.matmul %82, %84, %cst_44 {dimension_numbers = #tpu.dot_dimension_numbers<[2], [2], [1], [1], [0, 0, 0, 1, 1, 1], [0], [0]>} : vector<2x8x8xf32>, vector<2x8x8xf32>, vector<2x8x8xf32> -> vector<2x8x8xf32>
    "tpu.trace_stop"() : () -> ()
    %cst_45 = arith.constant 0.353553385 : f32
    %88 = vector.broadcast %cst_45 : f32 to vector<2x8x8xf32>
    %89 = arith.mulf %87, %88 : vector<2x8x8xf32>
    %cst_46 = arith.constant dense<0xFF800000> : vector<2x8xf32>
    %90 = vector.multi_reduction <maximumf>, %89, %cst_46 [2] : vector<2x8x8xf32> to vector<2x8xf32>
    %91 = vector.shape_cast %90 : vector<2x8xf32> to vector<2x8x1xf32>
    %92 = vector.broadcast %91 : vector<2x8x1xf32> to vector<2x8x8xf32>
    %93 = arith.subf %89, %92 : vector<2x8x8xf32>
    %94 = math.exp %93 : vector<2x8x8xf32>
    %cst_47 = arith.constant dense<0.000000e+00> : vector<2x8xf32>
    %95 = vector.multi_reduction <add>, %94, %cst_47 [2] : vector<2x8x8xf32> to vector<2x8xf32>
    %96 = vector.shape_cast %95 : vector<2x8xf32> to vector<2x8x1xf32>
    "tpu.trace_start"() <{level = 10 : i32, message = "bqk,bkd->bqd"}> : () -> ()
    %cst_48 = arith.constant dense<0.000000e+00> : vector<2x8x8xf32>
    %97 = tpu.matmul %94, %86, %cst_48 {dimension_numbers = #tpu.dot_dimension_numbers<[2], [1], [1], [2], [0, 0, 0, 1, 1, 2], [0], [0]>} : vector<2x8x8xf32>, vector<2x8x8xf32>, vector<2x8x8xf32> -> vector<2x8x8xf32>
    "tpu.trace_stop"() : () -> ()
    %98 = tpu.reciprocal %96 {approx = true} : vector<2x8x1xf32> -> vector<2x8x1xf32>
    %99 = vector.broadcast %98 : vector<2x8x1xf32> to vector<2x8x8xf32>
    %100 = arith.mulf %97, %99 : vector<2x8x8xf32>
    %101 = vector.shape_cast %100 : vector<2x8x8xf32> to vector<16x8xf32>
    %102 = vector.extract_strided_slice %55 {offsets = [8, 0], sizes = [8, 32], strides = [1, 1]} : vector<32x32xf32> to vector<8x32xf32>
    %cst_49 = arith.constant dense<0.000000e+00> : vector<16x32xf32>
    %103 = tpu.matmul %101, %102, %cst_49 {dimension_numbers = #tpu.dot_dimension_numbers<[1], [0], [0], [1], [0, 0, 1, 1], [], []>} : vector<16x8xf32>, vector<8x32xf32>, vector<16x32xf32> -> vector<16x32xf32>
    %104 = arith.addf %80, %103 : vector<16x32xf32>
    %105 = vector.extract_strided_slice %39 {offsets = [0, 16], sizes = [16, 8], strides = [1, 1]} : vector<16x32xf32> to vector<16x8xf32>
    %106 = vector.shape_cast %105 : vector<16x8xf32> to vector<2x8x8xf32>
    %107 = vector.extract_strided_slice %46 {offsets = [0, 16], sizes = [16, 8], strides = [1, 1]} : vector<16x32xf32> to vector<16x8xf32>
    %108 = vector.shape_cast %107 : vector<16x8xf32> to vector<2x8x8xf32>
    %109 = vector.extract_strided_slice %53 {offsets = [0, 16], sizes = [16, 8], strides = [1, 1]} : vector<16x32xf32> to vector<16x8xf32>
    %110 = vector.shape_cast %109 : vector<16x8xf32> to vector<2x8x8xf32>
    "tpu.trace_start"() <{level = 10 : i32, message = "bqd,bkd->bqk"}> : () -> ()
    %cst_50 = arith.constant dense<0.000000e+00> : vector<2x8x8xf32>
    %111 = tpu.matmul %106, %108, %cst_50 {dimension_numbers = #tpu.dot_dimension_numbers<[2], [2], [1], [1], [0, 0, 0, 1, 1, 1], [0], [0]>} : vector<2x8x8xf32>, vector<2x8x8xf32>, vector<2x8x8xf32> -> vector<2x8x8xf32>
    "tpu.trace_stop"() : () -> ()
    %cst_51 = arith.constant 0.353553385 : f32
    %112 = vector.broadcast %cst_51 : f32 to vector<2x8x8xf32>
    %113 = arith.mulf %111, %112 : vector<2x8x8xf32>
    %cst_52 = arith.constant dense<0xFF800000> : vector<2x8xf32>
    %114 = vector.multi_reduction <maximumf>, %113, %cst_52 [2] : vector<2x8x8xf32> to vector<2x8xf32>
    %115 = vector.shape_cast %114 : vector<2x8xf32> to vector<2x8x1xf32>
    %116 = vector.broadcast %115 : vector<2x8x1xf32> to vector<2x8x8xf32>
    %117 = arith.subf %113, %116 : vector<2x8x8xf32>
    %118 = math.exp %117 : vector<2x8x8xf32>
    %cst_53 = arith.constant dense<0.000000e+00> : vector<2x8xf32>
    %119 = vector.multi_reduction <add>, %118, %cst_53 [2] : vector<2x8x8xf32> to vector<2x8xf32>
    %120 = vector.shape_cast %119 : vector<2x8xf32> to vector<2x8x1xf32>
    "tpu.trace_start"() <{level = 10 : i32, message = "bqk,bkd->bqd"}> : () -> ()
    %cst_54 = arith.constant dense<0.000000e+00> : vector<2x8x8xf32>
    %121 = tpu.matmul %118, %110, %cst_54 {dimension_numbers = #tpu.dot_dimension_numbers<[2], [1], [1], [2], [0, 0, 0, 1, 1, 2], [0], [0]>} : vector<2x8x8xf32>, vector<2x8x8xf32>, vector<2x8x8xf32> -> vector<2x8x8xf32>
    "tpu.trace_stop"() : () -> ()
    %122 = tpu.reciprocal %120 {approx = true} : vector<2x8x1xf32> -> vector<2x8x1xf32>
    %123 = vector.broadcast %122 : vector<2x8x1xf32> to vector<2x8x8xf32>
    %124 = arith.mulf %121, %123 : vector<2x8x8xf32>
    %125 = vector.shape_cast %124 : vector<2x8x8xf32> to vector<16x8xf32>
    %126 = vector.extract_strided_slice %55 {offsets = [16, 0], sizes = [8, 32], strides = [1, 1]} : vector<32x32xf32> to vector<8x32xf32>
    %cst_55 = arith.constant dense<0.000000e+00> : vector<16x32xf32>
    %127 = tpu.matmul %125, %126, %cst_55 {dimension_numbers = #tpu.dot_dimension_numbers<[1], [0], [0], [1], [0, 0, 1, 1], [], []>} : vector<16x8xf32>, vector<8x32xf32>, vector<16x32xf32> -> vector<16x32xf32>
    %128 = arith.addf %104, %127 : vector<16x32xf32>
    %129 = vector.extract_strided_slice %39 {offsets = [0, 24], sizes = [16, 8], strides = [1, 1]} : vector<16x32xf32> to vector<16x8xf32>
    %130 = vector.shape_cast %129 : vector<16x8xf32> to vector<2x8x8xf32>
    %131 = vector.extract_strided_slice %46 {offsets = [0, 24], sizes = [16, 8], strides = [1, 1]} : vector<16x32xf32> to vector<16x8xf32>
    %132 = vector.shape_cast %131 : vector<16x8xf32> to vector<2x8x8xf32>
    %133 = vector.extract_strided_slice %53 {offsets = [0, 24], sizes = [16, 8], strides = [1, 1]} : vector<16x32xf32> to vector<16x8xf32>
    %134 = vector.shape_cast %133 : vector<16x8xf32> to vector<2x8x8xf32>
    "tpu.trace_start"() <{level = 10 : i32, message = "bqd,bkd->bqk"}> : () -> ()
    %cst_56 = arith.constant dense<0.000000e+00> : vector<2x8x8xf32>
    %135 = tpu.matmul %130, %132, %cst_56 {dimension_numbers = #tpu.dot_dimension_numbers<[2], [2], [1], [1], [0, 0, 0, 1, 1, 1], [0], [0]>} : vector<2x8x8xf32>, vector<2x8x8xf32>, vector<2x8x8xf32> -> vector<2x8x8xf32>
    "tpu.trace_stop"() : () -> ()
    %cst_57 = arith.constant 0.353553385 : f32
    %136 = vector.broadcast %cst_57 : f32 to vector<2x8x8xf32>
    %137 = arith.mulf %135, %136 : vector<2x8x8xf32>
    %cst_58 = arith.constant dense<0xFF800000> : vector<2x8xf32>
    %138 = vector.multi_reduction <maximumf>, %137, %cst_58 [2] : vector<2x8x8xf32> to vector<2x8xf32>
    %139 = vector.shape_cast %138 : vector<2x8xf32> to vector<2x8x1xf32>
    %140 = vector.broadcast %139 : vector<2x8x1xf32> to vector<2x8x8xf32>
    %141 = arith.subf %137, %140 : vector<2x8x8xf32>
    %142 = math.exp %141 : vector<2x8x8xf32>
    %cst_59 = arith.constant dense<0.000000e+00> : vector<2x8xf32>
    %143 = vector.multi_reduction <add>, %142, %cst_59 [2] : vector<2x8x8xf32> to vector<2x8xf32>
    %144 = vector.shape_cast %143 : vector<2x8xf32> to vector<2x8x1xf32>
    "tpu.trace_start"() <{level = 10 : i32, message = "bqk,bkd->bqd"}> : () -> ()
    %cst_60 = arith.constant dense<0.000000e+00> : vector<2x8x8xf32>
    %145 = tpu.matmul %142, %134, %cst_60 {dimension_numbers = #tpu.dot_dimension_numbers<[2], [1], [1], [2], [0, 0, 0, 1, 1, 2], [0], [0]>} : vector<2x8x8xf32>, vector<2x8x8xf32>, vector<2x8x8xf32> -> vector<2x8x8xf32>
    "tpu.trace_stop"() : () -> ()
    %146 = tpu.reciprocal %144 {approx = true} : vector<2x8x1xf32> -> vector<2x8x1xf32>
    %147 = vector.broadcast %146 : vector<2x8x1xf32> to vector<2x8x8xf32>
    %148 = arith.mulf %145, %147 : vector<2x8x8xf32>
    %149 = vector.shape_cast %148 : vector<2x8x8xf32> to vector<16x8xf32>
    %150 = vector.extract_strided_slice %55 {offsets = [24, 0], sizes = [8, 32], strides = [1, 1]} : vector<32x32xf32> to vector<8x32xf32>
    %cst_61 = arith.constant dense<0.000000e+00> : vector<16x32xf32>
    %151 = tpu.matmul %149, %150, %cst_61 {dimension_numbers = #tpu.dot_dimension_numbers<[1], [0], [0], [1], [0, 0, 1, 1], [], []>} : vector<16x8xf32>, vector<8x32xf32>, vector<16x32xf32> -> vector<16x32xf32>
    %152 = arith.addf %128, %151 : vector<16x32xf32>
    %c0_62 = arith.constant 0 : index
    %c0_63 = arith.constant 0 : index
    %c0_64 = arith.constant 0 : index
    %153 = vector.load %arg11[%c0_62, %c0_63, %c0_64] : memref<1x1x32xf32, #tpu.memory_space<vmem>>, vector<1x1x32xf32>
    %154 = vector.shape_cast %153 : vector<1x1x32xf32> to vector<1x32xf32>
    %155 = vector.broadcast %154 : vector<1x32xf32> to vector<16x32xf32>
    %156 = arith.addf %152, %155 : vector<16x32xf32>
    %157 = vector.shape_cast %156 : vector<16x32xf32> to vector<2x8x32xf32>
    %158 = arith.addf %3, %157 : vector<2x8x32xf32>
    %c0_65 = arith.constant 0 : index
    %c0_66 = arith.constant 0 : index
    %c0_67 = arith.constant 0 : index
    %159 = vector.load %arg12[%c0_65, %c0_66, %c0_67] : memref<1x1x32xf32, #tpu.memory_space<vmem>>, vector<1x1x32xf32>
    %160 = vector.shape_cast %159 : vector<1x1x32xf32> to vector<1x32xf32>
    %c0_68 = arith.constant 0 : index
    %c0_69 = arith.constant 0 : index
    %c0_70 = arith.constant 0 : index
    %161 = vector.load %arg13[%c0_68, %c0_69, %c0_70] : memref<1x1x32xf32, #tpu.memory_space<vmem>>, vector<1x1x32xf32>
    %162 = vector.shape_cast %161 : vector<1x1x32xf32> to vector<1x32xf32>
    %cst_71 = arith.constant dense<0.000000e+00> : vector<2x8xf32>
    %163 = vector.multi_reduction <add>, %158, %cst_71 [2] : vector<2x8x32xf32> to vector<2x8xf32>
    %164 = vector.shape_cast %163 : vector<2x8xf32> to vector<2x8x1xf32>
    %cst_72 = arith.constant 3.200000e+01 : f32
    %165 = vector.broadcast %cst_72 : f32 to vector<2x8x1xf32>
    %166 = arith.divf %164, %165 : vector<2x8x1xf32>
    %167 = vector.broadcast %166 : vector<2x8x1xf32> to vector<2x8x32xf32>
    %168 = arith.subf %158, %167 : vector<2x8x32xf32>
    %169 = arith.mulf %168, %168 : vector<2x8x32xf32>
    %cst_73 = arith.constant dense<0.000000e+00> : vector<2x8xf32>
    %170 = vector.multi_reduction <add>, %169, %cst_73 [2] : vector<2x8x32xf32> to vector<2x8xf32>
    %171 = vector.shape_cast %170 : vector<2x8xf32> to vector<2x8x1xf32>
    %cst_74 = arith.constant 3.200000e+01 : f32
    %172 = vector.broadcast %cst_74 : f32 to vector<2x8x1xf32>
    %173 = arith.divf %171, %172 : vector<2x8x1xf32>
    %174 = vector.broadcast %166 : vector<2x8x1xf32> to vector<2x8x32xf32>
    %175 = arith.subf %158, %174 : vector<2x8x32xf32>
    %cst_75 = arith.constant 9.99999974E-6 : f32
    %176 = vector.broadcast %cst_75 : f32 to vector<2x8x1xf32>
    %177 = arith.addf %173, %176 : vector<2x8x1xf32>
    %178 = math.rsqrt %177 : vector<2x8x1xf32>
    %179 = vector.broadcast %178 : vector<2x8x1xf32> to vector<2x8x32xf32>
    %180 = arith.mulf %175, %179 : vector<2x8x32xf32>
    %181 = vector.shape_cast %160 : vector<1x32xf32> to vector<1x1x32xf32>
    %182 = vector.broadcast %181 : vector<1x1x32xf32> to vector<2x8x32xf32>
    %183 = arith.mulf %180, %182 : vector<2x8x32xf32>
    %184 = vector.shape_cast %162 : vector<1x32xf32> to vector<1x1x32xf32>
    %185 = vector.broadcast %184 : vector<1x1x32xf32> to vector<2x8x32xf32>
    %186 = arith.addf %183, %185 : vector<2x8x32xf32>
    %187 = vector.shape_cast %186 : vector<2x8x32xf32> to vector<16x32xf32>
    %c0_76 = arith.constant 0 : index
    %c0_77 = arith.constant 0 : index
    %c0_78 = arith.constant 0 : index
    %188 = vector.load %arg14[%c0_76, %c0_77, %c0_78] : memref<1x32x64xf32, #tpu.memory_space<vmem>>, vector<1x32x64xf32>
    %189 = vector.shape_cast %188 : vector<1x32x64xf32> to vector<32x64xf32>
    %cst_79 = arith.constant dense<0.000000e+00> : vector<16x64xf32>
    %190 = tpu.matmul %187, %189, %cst_79 {dimension_numbers = #tpu.dot_dimension_numbers<[1], [0], [0], [1], [0, 0, 1, 1], [], []>} : vector<16x32xf32>, vector<32x64xf32>, vector<16x64xf32> -> vector<16x64xf32>
    %c0_80 = arith.constant 0 : index
    %c0_81 = arith.constant 0 : index
    %c0_82 = arith.constant 0 : index
    %191 = vector.load %arg15[%c0_80, %c0_81, %c0_82] : memref<1x1x64xf32, #tpu.memory_space<vmem>>, vector<1x1x64xf32>
    %192 = vector.shape_cast %191 : vector<1x1x64xf32> to vector<1x64xf32>
    %193 = vector.broadcast %192 : vector<1x64xf32> to vector<16x64xf32>
    %194 = arith.addf %190, %193 : vector<16x64xf32>
    %cst_83 = arith.constant 0.000000e+00 : f32
    %195 = vector.broadcast %cst_83 : f32 to vector<16x64xf32>
    %196 = arith.maximumf %194, %195 : vector<16x64xf32>
    %c0_84 = arith.constant 0 : index
    %c0_85 = arith.constant 0 : index
    %c0_86 = arith.constant 0 : index
    %197 = vector.load %arg16[%c0_84, %c0_85, %c0_86] : memref<1x64x32xf32, #tpu.memory_space<vmem>>, vector<1x64x32xf32>
    %198 = vector.shape_cast %197 : vector<1x64x32xf32> to vector<64x32xf32>
    %cst_87 = arith.constant dense<0.000000e+00> : vector<16x32xf32>
    %199 = tpu.matmul %196, %198, %cst_87 {dimension_numbers = #tpu.dot_dimension_numbers<[1], [0], [0], [1], [0, 0, 1, 1], [], []>} : vector<16x64xf32>, vector<64x32xf32>, vector<16x32xf32> -> vector<16x32xf32>
    %c0_88 = arith.constant 0 : index
    %c0_89 = arith.constant 0 : index
    %c0_90 = arith.constant 0 : index
    %200 = vector.load %arg17[%c0_88, %c0_89, %c0_90] : memref<1x1x32xf32, #tpu.memory_space<vmem>>, vector<1x1x32xf32>
    %201 = vector.shape_cast %200 : vector<1x1x32xf32> to vector<1x32xf32>
    %202 = vector.broadcast %201 : vector<1x32xf32> to vector<16x32xf32>
    %203 = arith.addf %199, %202 : vector<16x32xf32>
    %204 = vector.shape_cast %203 : vector<16x32xf32> to vector<2x8x32xf32>
    %205 = arith.addf %158, %204 : vector<2x8x32xf32>
    %c0_91 = arith.constant 0 : index
    %c0_92 = arith.constant 0 : index
    %c0_93 = arith.constant 0 : index
    %206 = vector.load %arg21[%c0_91, %c0_92, %c0_93] : memref<2x8x32xf32, #tpu.memory_space<vmem>>, vector<2x8x32xf32>
    tpu.vector_store %arg21[%c0_91, %c0_92, %c0_93], %205 {strides = array<i32>} : memref<2x8x32xf32, #tpu.memory_space<vmem>>, vector<2x8x32xf32>,
    %c1_i32 = arith.constant 1 : i32
    %207 = arith.cmpi eq, %arg0, %c1_i32 : i32
    %208 = arith.extui %207 : i1 to i32
    %c0_i32_94 = arith.constant 0 : i32
    %209 = arith.cmpi ne, %208, %c0_i32_94 : i32
    scf.if %209 {
      %c0_95 = arith.constant 0 : index
      %c0_96 = arith.constant 0 : index
      %210 = vector.load %arg18[%c0_95, %c0_96] : memref<1x32xf32, #tpu.memory_space<vmem>>, vector<1x32xf32>
      %c0_97 = arith.constant 0 : index
      %c0_98 = arith.constant 0 : index
      %211 = vector.load %arg19[%c0_97, %c0_98] : memref<1x32xf32, #tpu.memory_space<vmem>>, vector<1x32xf32>
      %cst_99 = arith.constant dense<0.000000e+00> : vector<2x8xf32>
      %212 = vector.multi_reduction <add>, %205, %cst_99 [2] : vector<2x8x32xf32> to vector<2x8xf32>
      %213 = vector.shape_cast %212 : vector<2x8xf32> to vector<2x8x1xf32>
      %cst_100 = arith.constant 3.200000e+01 : f32
      %214 = vector.broadcast %cst_100 : f32 to vector<2x8x1xf32>
      %215 = arith.divf %213, %214 : vector<2x8x1xf32>
      %216 = vector.broadcast %215 : vector<2x8x1xf32> to vector<2x8x32xf32>
      %217 = arith.subf %205, %216 : vector<2x8x32xf32>
      %218 = arith.mulf %217, %217 : vector<2x8x32xf32>
      %cst_101 = arith.constant dense<0.000000e+00> : vector<2x8xf32>
      %219 = vector.multi_reduction <add>, %218, %cst_101 [2] : vector<2x8x32xf32> to vector<2x8xf32>
      %220 = vector.shape_cast %219 : vector<2x8xf32> to vector<2x8x1xf32>
      %cst_102 = arith.constant 3.200000e+01 : f32
      %221 = vector.broadcast %cst_102 : f32 to vector<2x8x1xf32>
      %222 = arith.divf %220, %221 : vector<2x8x1xf32>
      %223 = vector.broadcast %215 : vector<2x8x1xf32> to vector<2x8x32xf32>
      %224 = arith.subf %205, %223 : vector<2x8x32xf32>
      %cst_103 = arith.constant 9.99999974E-6 : f32
      %225 = vector.broadcast %cst_103 : f32 to vector<2x8x1xf32>
      %226 = arith.addf %222, %225 : vector<2x8x1xf32>
      %227 = math.rsqrt %226 : vector<2x8x1xf32>
      %228 = vector.broadcast %227 : vector<2x8x1xf32> to vector<2x8x32xf32>
      %229 = arith.mulf %224, %228 : vector<2x8x32xf32>
      %230 = vector.shape_cast %210 : vector<1x32xf32> to vector<1x1x32xf32>
      %231 = vector.broadcast %230 : vector<1x1x32xf32> to vector<2x8x32xf32>
      %232 = arith.mulf %229, %231 : vector<2x8x32xf32>
      %233 = vector.shape_cast %211 : vector<1x32xf32> to vector<1x1x32xf32>
      %234 = vector.broadcast %233 : vector<1x1x32xf32> to vector<2x8x32xf32>
      %235 = arith.addf %232, %234 : vector<2x8x32xf32>
      %c0_104 = arith.constant 0 : index
      %c0_105 = arith.constant 0 : index
      %c0_106 = arith.constant 0 : index
      %236 = vector.load %arg20[%c0_104, %c0_105, %c0_106] : memref<2x8x32xf32, #tpu.memory_space<vmem>>, vector<2x8x32xf32>
      tpu.vector_store %arg20[%c0_104, %c0_105, %c0_106], %235 {strides = array<i32>} : memref<2x8x32xf32, #tpu.memory_space<vmem>>, vector<2x8x32xf32>,
    } else {
    }
    return
  }
  func.func @transform_0(%arg0: i32) -> (i32, i32, i32) {
    %c0_i32 = arith.constant 0 : i32
    %c0_i32_0 = arith.constant 0 : i32
    %c0_i32_1 = arith.constant 0 : i32
    %c0_i32_2 = arith.constant 0 : i32
    return %c0_i32, %c0_i32_0, %c0_i32_1 : i32, i32, i32
  }
  func.func @transform_1(%arg0: i32) -> (i32, i32, i32) {
    %c0_i32 = arith.constant 0 : i32
    %c0_i32_0 = arith.constant 0 : i32
    %c0_i32_1 = arith.constant 0 : i32
    return %arg0, %c0_i32, %c0_i32_0 : i32, i32, i32
  }
  func.func @transform_2(%arg0: i32) -> (i32, i32, i32) {
    %c0_i32 = arith.constant 0 : i32
    %c0_i32_0 = arith.constant 0 : i32
    %c0_i32_1 = arith.constant 0 : i32
    return %arg0, %c0_i32, %c0_i32_0 : i32, i32, i32
  }
  func.func @transform_3(%arg0: i32) -> (i32, i32, i32) {
    %c0_i32 = arith.constant 0 : i32
    %c0_i32_0 = arith.constant 0 : i32
    %c0_i32_1 = arith.constant 0 : i32
    return %arg0, %c0_i32, %c0_i32_0 : i32, i32, i32
  }
  func.func @transform_4(%arg0: i32) -> (i32, i32, i32) {
    %c0_i32 = arith.constant 0 : i32
    %c0_i32_0 = arith.constant 0 : i32
    %c0_i32_1 = arith.constant 0 : i32
    return %arg0, %c0_i32, %c0_i32_0 : i32, i32, i32
  }
  func.func @transform_5(%arg0: i32) -> (i32, i32, i32) {
    %c0_i32 = arith.constant 0 : i32
    %c0_i32_0 = arith.constant 0 : i32
    %c0_i32_1 = arith.constant 0 : i32
    return %arg0, %c0_i32, %c0_i32_0 : i32, i32, i32
  }
  func.func @transform_6(%arg0: i32) -> (i32, i32, i32) {
    %c0_i32 = arith.constant 0 : i32
    %c0_i32_0 = arith.constant 0 : i32
    %c0_i32_1 = arith.constant 0 : i32
    return %arg0, %c0_i32, %c0_i32_0 : i32, i32, i32
  }
  func.func @transform_7(%arg0: i32) -> (i32, i32, i32) {
    %c0_i32 = arith.constant 0 : i32
    %c0_i32_0 = arith.constant 0 : i32
    %c0_i32_1 = arith.constant 0 : i32
    return %arg0, %c0_i32, %c0_i32_0 : i32, i32, i32
  }
  func.func @transform_8(%arg0: i32) -> (i32, i32, i32) {
    %c0_i32 = arith.constant 0 : i32
    %c0_i32_0 = arith.constant 0 : i32
    %c0_i32_1 = arith.constant 0 : i32
    return %arg0, %c0_i32, %c0_i32_0 : i32, i32, i32
  }
  func.func @transform_9(%arg0: i32) -> (i32, i32, i32) {
    %c0_i32 = arith.constant 0 : i32
    %c0_i32_0 = arith.constant 0 : i32
    %c0_i32_1 = arith.constant 0 : i32
    return %arg0, %c0_i32, %c0_i32_0 : i32, i32, i32
  }
  func.func @transform_10(%arg0: i32) -> (i32, i32, i32) {
    %c0_i32 = arith.constant 0 : i32
    %c0_i32_0 = arith.constant 0 : i32
    %c0_i32_1 = arith.constant 0 : i32
    return %arg0, %c0_i32, %c0_i32_0 : i32, i32, i32
  }
  func.func @transform_11(%arg0: i32) -> (i32, i32, i32) {
    %c0_i32 = arith.constant 0 : i32
    %c0_i32_0 = arith.constant 0 : i32
    %c0_i32_1 = arith.constant 0 : i32
    return %arg0, %c0_i32, %c0_i32_0 : i32, i32, i32
  }
  func.func @transform_12(%arg0: i32) -> (i32, i32, i32) {
    %c0_i32 = arith.constant 0 : i32
    %c0_i32_0 = arith.constant 0 : i32
    %c0_i32_1 = arith.constant 0 : i32
    return %arg0, %c0_i32, %c0_i32_0 : i32, i32, i32
  }
  func.func @transform_13(%arg0: i32) -> (i32, i32, i32) {
    %c0_i32 = arith.constant 0 : i32
    %c0_i32_0 = arith.constant 0 : i32
    %c0_i32_1 = arith.constant 0 : i32
    return %arg0, %c0_i32, %c0_i32_0 : i32, i32, i32
  }
  func.func @transform_14(%arg0: i32) -> (i32, i32, i32) {
    %c0_i32 = arith.constant 0 : i32
    %c0_i32_0 = arith.constant 0 : i32
    %c0_i32_1 = arith.constant 0 : i32
    return %arg0, %c0_i32, %c0_i32_0 : i32, i32, i32
  }
  func.func @transform_15(%arg0: i32) -> (i32, i32, i32) {
    %c0_i32 = arith.constant 0 : i32
    %c0_i32_0 = arith.constant 0 : i32
    %c0_i32_1 = arith.constant 0 : i32
    return %arg0, %c0_i32, %c0_i32_0 : i32, i32, i32
  }
  func.func @transform_16(%arg0: i32) -> (i32, i32, i32) {
    %c0_i32 = arith.constant 0 : i32
    %c0_i32_0 = arith.constant 0 : i32
    %c0_i32_1 = arith.constant 0 : i32
    return %arg0, %c0_i32, %c0_i32_0 : i32, i32, i32
  }
  func.func @transform_17(%arg0: i32) -> (i32, i32) {
    %c0_i32 = arith.constant 0 : i32
    %c0_i32_0 = arith.constant 0 : i32
    %c0_i32_1 = arith.constant 0 : i32
    return %c0_i32, %c0_i32_0 : i32, i32
  }
  func.func @transform_18(%arg0: i32) -> (i32, i32) {
    %c0_i32 = arith.constant 0 : i32
    %c0_i32_0 = arith.constant 0 : i32
    %c0_i32_1 = arith.constant 0 : i32
    return %c0_i32, %c0_i32_0 : i32, i32
  }
  func.func @transform_19(%arg0: i32) -> (i32, i32, i32) {
    %c0_i32 = arith.constant 0 : i32
    %c0_i32_0 = arith.constant 0 : i32
    %c0_i32_1 = arith.constant 0 : i32
    %c0_i32_2 = arith.constant 0 : i32
    return %c0_i32, %c0_i32_0, %c0_i32_1 : i32, i32, i32
  }
}

</mosaic_0001>

<llo_original>
// kernel: tpu_custom_call.1
$region0: #{tpu_custom_call.1}
  #allocation0 [shape = 'u32[]', space=smem, size = 0x4, offset = 0x4, fixed_abs, tag = 'smem constant byte address 0x4 - core index']
  #allocation1 [shape = 'u32[72,128]{1,0:T(1,128)}', space=vmem, size = 0x9000, scoped, tag = 'internal scratch']
  #allocation2 [shape = 'f32[2,8,32]{2,1,0:T(8,128)}', space=vmem, size = 0x2000, scoped, tag = 'scratch operand']
  %s0 = inlined_call_operand.hbm [shape: f32[2,8,32], index: 0, kind: input, shape index: {}]
  %s1 = inlined_call_operand.hbm [shape: f32[2,1,32], index: 1, kind: input, shape index: {}]
  %s2 = inlined_call_operand.hbm [shape: f32[2,1,32], index: 2, kind: input, shape index: {}]
  %s3 = inlined_call_operand.vmem [shape: f32[2,32,32], index: 3, kind: input, shape index: {}]
  %s4 = inlined_call_operand.vmem [shape: f32[2,1,32], index: 4, kind: input, shape index: {}]
  %s5 = inlined_call_operand.vmem [shape: f32[2,32,32], index: 5, kind: input, shape index: {}]
  %s6 = inlined_call_operand.vmem [shape: f32[2,1,32], index: 6, kind: input, shape index: {}]
  %s7 = inlined_call_operand.vmem [shape: f32[2,32,32], index: 7, kind: input, shape index: {}]
  %s8 = inlined_call_operand.hbm [shape: f32[2,1,32], index: 8, kind: input, shape index: {}]
  %s9 = inlined_call_operand.hbm [shape: f32[2,32,32], index: 9, kind: input, shape index: {}]
  %s10 = inlined_call_operand.vmem [shape: f32[2,1,32], index: 10, kind: input, shape index: {}]
  %s11 = inlined_call_operand.vmem [shape: f32[2,1,32], index: 11, kind: input, shape index: {}]
  %s12 = inlined_call_operand.vmem [shape: f32[2,1,32], index: 12, kind: input, shape index: {}]
  %s13 = inlined_call_operand.hbm [shape: f32[2,32,64], index: 13, kind: input, shape index: {}]
  %s14 = inlined_call_operand.hbm [shape: f32[2,1,64], index: 14, kind: input, shape index: {}]
  %s15 = inlined_call_operand.vmem [shape: f32[2,64,32], index: 15, kind: input, shape index: {}]
  %s16 = inlined_call_operand.vmem [shape: f32[2,1,32], index: 16, kind: input, shape index: {}]
  %s17 = inlined_call_operand.vmem [shape: f32[1,32], index: 17, kind: input, shape index: {}]
  %s18 = inlined_call_operand.vmem [shape: f32[1,32], index: 18, kind: input, shape index: {}]
  %s19 = inlined_call_operand.hbm [shape: f32[2,8,32], index: 19, kind: output, shape index: {}]
  %s20 = sld [smem:[#allocation0]]
  $region145: #{tpu_custom_call.1} parent=0
    _
  %s22 = ssub.s32 1, %s20
  %s23 = scalar_select 0, %s22, %s20
  $region1: #{tpu_custom_call.1} parent=0
    #allocation3 [shape = 'u8[8192]{0}', space=vmem, size = 0x2000, scoped, tag = 'input window, operand 0, single buffered']
    #allocation4 [shape = 's32[2]{0}', space=sflag, size = 0x8, scoped, tag = 'scoped memory for tpu_custom_call.1']
    #allocation5 [shape = 's32[2]{0}', space=sflag, size = 0x8, scoped, tag = 'scoped memory for tpu_custom_call.1']
    #allocation6 [shape = 'u8[1024]{0}', space=vmem, size = 0x400, scoped, tag = 'input window, operand 1']
    #allocation7 [shape = 's32[2]{0}', space=sflag, size = 0x8, scoped, tag = 'scoped memory for tpu_custom_call.1']
    #allocation8 [shape = 'u8[1024]{0}', space=vmem, size = 0x400, scoped, tag = 'input window, operand 2']
    #allocation9 [shape = 'u8[1024]{0}', space=vmem, size = 0x400, scoped, tag = 'input window, operand 8']
    #allocation10 [shape = 's32[2]{0}', space=sflag, size = 0x8, scoped, tag = 'scoped memory for tpu_custom_call.1']
    #allocation11 [shape = 'u8[32768]{0}', space=vmem, size = 0x8000, scoped, tag = 'input window, operand 9']
    #allocation12 [shape = 'u8[32768]{0}', space=vmem, size = 0x8000, scoped, tag = 'input window, operand 13']
    #allocation13 [shape = 's32[2]{0}', space=sflag, size = 0x8, scoped, tag = 'scoped memory for tpu_custom_call.1']
    #allocation14 [shape = 'u8[1024]{0}', space=vmem, size = 0x400, scoped, tag = 'input window, operand 14']
    #allocation15 [shape = 'u8[8192]{0}', space=vmem, size = 0x2000, scoped, tag = 'output window, operand 0, single buffered']
    %24 = vsyncpa [#allocation4], 0
    %25 = vsyncpa [#allocation7], 0
    %s26 = scalar_lea.sflag [#allocation7], 1
    %27 = vsyncpa %s26, 0
    %28 = vsyncpa [#allocation10], 0
    %s29 = scalar_lea.sflag [#allocation10], 1
    %30 = vsyncpa %s29, 0
    %31 = vsyncpa [#allocation13], 0
    %s32 = scalar_lea.sflag [#allocation13], 1
    %33 = vsyncpa %s32, 0
    %34 = vsyncpa [#allocation5], 0
    loop: start=0, step=1, limit=4
    $region2: #{tpu_custom_call.1} parent=1 // loop_pre_header
      _
    $region3: #{tpu_custom_call.1} parent=1 // loop_header
      %s36 = sphi 0, %s40
      %p37 = scmp.ge.s32.totalorder %s36, 4
      %s44 = sphi 0, %s44
      %s46 = sphi 0, %s44
      %s47 = sphi 0, %s46
      %s61 = sphi 0, %s47
      %s67 = sphi 0, %s69
      %s70 = sphi 0, %s67
      %s71 = sphi 0, %s70
      %s87 = sphi 0, %s71
      %s93 = sphi 0, %s95
      %s96 = sphi 0, %s93
      %s97 = sphi 0, %s96
      %s113 = sphi 0, %s97
      %s119 = sphi 0, %s121
      %s122 = sphi 0, %s119
      %s123 = sphi 0, %s122
      %s139 = sphi 0, %s123
      %s145 = sphi 0, %s147
      %s148 = sphi 0, %s145
      %s149 = sphi 0, %s148
      %s165 = sphi 0, %s149
      %s171 = sphi 0, %s173
      %s174 = sphi 0, %s171
      %s175 = sphi 0, %s174
      %s191 = sphi 0, %s175
      %s197 = sphi 0, %s199
      %s200 = sphi 0, %s197
      %s201 = sphi 0, %s200
      %s217 = sphi 0, %s201
      %s223 = sphi 0, %s225
      %s226 = sphi 0, %s223
      %s227 = sphi 0, %s226
      %s243 = sphi 0, %s227
      %s249 = sphi 0, %s251
      %s252 = sphi 0, %s249
      %s253 = sphi 0, %s252
      %s269 = sphi 0, %s253
      %s275 = sphi 0, %s277
      %s278 = sphi 0, %s275
      %s279 = sphi 0, %s278
      %s295 = sphi 0, %s279
      %s301 = sphi 0, %s303
      %s304 = sphi 0, %s301
      %s305 = sphi 0, %s304
      %s321 = sphi 0, %s305
      %s327 = sphi 0, %s329
      %s330 = sphi 0, %s327
      %s331 = sphi 0, %s330
      %s347 = sphi 0, %s331
      %s353 = sphi 0, %s355
      %s356 = sphi 0, %s353
      %s357 = sphi 0, %s356
      %s373 = sphi 0, %s357
      %s379 = sphi 0, %s381
      %s382 = sphi 0, %s379
      %s383 = sphi 0, %s382
      %s399 = sphi 0, %s383
      %s405 = sphi 0, %s407
      %s408 = sphi 0, %s405
      %s409 = sphi 0, %s408
      %s425 = sphi 0, %s409
      %s431 = sphi 0, %s433
      %s434 = sphi 0, %s431
      %s435 = sphi 0, %s434
      %s451 = sphi 0, %s435
      %s457 = sphi 0, %s459
      %s460 = sphi 0, %s457
      %s461 = sphi 0, %s460
      %s477 = sphi 0, %s461
      %s481 = sphi 0, %s481
      %s483 = sphi 0, %s481
      %s484 = sphi 0, %s483
      %s498 = sphi 0, %s484
      %s502 = sphi 0, %s502
      %s504 = sphi 0, %s502
      %s505 = sphi 0, %s504
      %s519 = sphi 0, %s505
      %s523 = sphi 0, %s523
      %s525 = sphi 0, %s523
      %s526 = sphi 0, %s525
      %s540 = sphi 0, %s526
    $region4: #{tpu_custom_call.1} parent=1 // loop_header_branch
      %39 = sbr.rel (%p37) target = $region8
    $region5: #{tpu_custom_call.1} parent=1 // loop_body
      %s41 = ssub.s32 %s36, 1
      %s42 = ssub.s32 %s36, 2
      %s43 = sadd.s32 %s36, 1
      %s45 = sadd.s32 %s44, 1
      %p48 = scmp.eq.s32.totalorder %s36, 1
      %p49 = scmp.ne.s32.totalorder %s44, %s46
      %p50 = scmp.eq.s32.totalorder %s36, 0
      %p51 = por %p49, %p50
      %p52 = scmp.ne.s32.totalorder %s44, %s46
      %p53 = scmp.eq.s32.totalorder %s41, 1
      %p54 = por %p52, %p53
      %p55 = scmp.ne.s32.totalorder %s46, %s47
      %p56 = scmp.eq.s32.totalorder %s41, 0
      %p57 = por %p55, %p56
      %p58 = scmp.ne.s32.totalorder %s46, %s47
      %p59 = scmp.eq.s32.totalorder %s42, 1
      %p60 = por %p58, %p59
      %p62 = scmp.ne.s32.totalorder %s47, %s61
      %p63 = scmp.eq.s32.totalorder %s42, 0
      %p64 = por %p62, %p63
      %s65 = ssub.s32 %s36, %s43
      %p66 = scmp.eq.s32.totalorder %s65, 0
      %s68 = sadd.s32 %s67, 1
      %s69 = scalar_select %p66, %s67, %s68
      %p72 = pneg %p66
      %p73 = scmp.eq.s32.totalorder %s36, 1
      %p74 = por %p72, %p73
      %p75 = scmp.ne.s32.totalorder %s67, %s70
      %p76 = scmp.eq.s32.totalorder %s36, 0
      %p77 = por %p75, %p76
      %p78 = scmp.ne.s32.totalorder %s67, %s70
      %p79 = scmp.eq.s32.totalorder %s41, 1
      %p80 = por %p78, %p79
      %p81 = scmp.ne.s32.totalorder %s70, %s71
      %p82 = scmp.eq.s32.totalorder %s41, 0
      %p83 = por %p81, %p82
      %p84 = scmp.ne.s32.totalorder %s70, %s71
      %p85 = scmp.eq.s32.totalorder %s42, 1
      %p86 = por %p84, %p85
      %p88 = scmp.ne.s32.totalorder %s71, %s87
      %p89 = scmp.eq.s32.totalorder %s42, 0
      %p90 = por %p88, %p89
      %s91 = ssub.s32 %s36, %s43
      %p92 = scmp.eq.s32.totalorder %s91, 0
      %s94 = sadd.s32 %s93, 1
      %s95 = scalar_select %p92, %s93, %s94
      %p98 = pneg %p92
      %p99 = scmp.eq.s32.totalorder %s36, 1
      %p100 = por %p98, %p99
      %p101 = scmp.ne.s32.totalorder %s93, %s96
      %p102 = scmp.eq.s32.totalorder %s36, 0
      %p103 = por %p101, %p102
      %p104 = scmp.ne.s32.totalorder %s93, %s96
      %p105 = scmp.eq.s32.totalorder %s41, 1
      %p106 = por %p104, %p105
      %p107 = scmp.ne.s32.totalorder %s96, %s97
      %p108 = scmp.eq.s32.totalorder %s41, 0
      %p109 = por %p107, %p108
      %p110 = scmp.ne.s32.totalorder %s96, %s97
      %p111 = scmp.eq.s32.totalorder %s42, 1
      %p112 = por %p110, %p111
      %p114 = scmp.ne.s32.totalorder %s97, %s113
      %p115 = scmp.eq.s32.totalorder %s42, 0
      %p116 = por %p114, %p115
      %s117 = ssub.s32 %s36, %s43
      %p118 = scmp.eq.s32.totalorder %s117, 0
      %s120 = sadd.s32 %s119, 1
      %s121 = scalar_select %p118, %s119, %s120
      %p124 = pneg %p118
      %p125 = scmp.eq.s32.totalorder %s36, 1
      %p126 = por %p124, %p125
      %p127 = scmp.ne.s32.totalorder %s119, %s122
      %p128 = scmp.eq.s32.totalorder %s36, 0
      %p129 = por %p127, %p128
      %p130 = scmp.ne.s32.totalorder %s119, %s122
      %p131 = scmp.eq.s32.totalorder %s41, 1
      %p132 = por %p130, %p131
      %p133 = scmp.ne.s32.totalorder %s122, %s123
      %p134 = scmp.eq.s32.totalorder %s41, 0
      %p135 = por %p133, %p134
      %p136 = scmp.ne.s32.totalorder %s122, %s123
      %p137 = scmp.eq.s32.totalorder %s42, 1
      %p138 = por %p136, %p137
      %p140 = scmp.ne.s32.totalorder %s123, %s139
      %p141 = scmp.eq.s32.totalorder %s42, 0
      %p142 = por %p140, %p141
      %s143 = ssub.s32 %s36, %s43
      %p144 = scmp.eq.s32.totalorder %s143, 0
      %s146 = sadd.s32 %s145, 1
      %s147 = scalar_select %p144, %s145, %s146
      %p150 = pneg %p144
      %p151 = scmp.eq.s32.totalorder %s36, 1
      %p152 = por %p150, %p151
      %p153 = scmp.ne.s32.totalorder %s145, %s148
      %p154 = scmp.eq.s32.totalorder %s36, 0
      %p155 = por %p153, %p154
      %p156 = scmp.ne.s32.totalorder %s145, %s148
      %p157 = scmp.eq.s32.totalorder %s41, 1
      %p158 = por %p156, %p157
      %p159 = scmp.ne.s32.totalorder %s148, %s149
      %p160 = scmp.eq.s32.totalorder %s41, 0
      %p161 = por %p159, %p160
      %p162 = scmp.ne.s32.totalorder %s148, %s149
      %p163 = scmp.eq.s32.totalorder %s42, 1
      %p164 = por %p162, %p163
      %p166 = scmp.ne.s32.totalorder %s149, %s165
      %p167 = scmp.eq.s32.totalorder %s42, 0
      %p168 = por %p166, %p167
      %s169 = ssub.s32 %s36, %s43
      %p170 = scmp.eq.s32.totalorder %s169, 0
      %s172 = sadd.s32 %s171, 1
      %s173 = scalar_select %p170, %s171, %s172
      %p176 = pneg %p170
      %p177 = scmp.eq.s32.totalorder %s36, 1
      %p178 = por %p176, %p177
      %p179 = scmp.ne.s32.totalorder %s171, %s174
      %p180 = scmp.eq.s32.totalorder %s36, 0
      %p181 = por %p179, %p180
      %p182 = scmp.ne.s32.totalorder %s171, %s174
      %p183 = scmp.eq.s32.totalorder %s41, 1
      %p184 = por %p182, %p183
      %p185 = scmp.ne.s32.totalorder %s174, %s175
      %p186 = scmp.eq.s32.totalorder %s41, 0
      %p187 = por %p185, %p186
      %p188 = scmp.ne.s32.totalorder %s174, %s175
      %p189 = scmp.eq.s32.totalorder %s42, 1
      %p190 = por %p188, %p189
      %p192 = scmp.ne.s32.totalorder %s175, %s191
      %p193 = scmp.eq.s32.totalorder %s42, 0
      %p194 = por %p192, %p193
      %s195 = ssub.s32 %s36, %s43
      %p196 = scmp.eq.s32.totalorder %s195, 0
      %s198 = sadd.s32 %s197, 1
      %s199 = scalar_select %p196, %s197, %s198
      %p202 = pneg %p196
      %p203 = scmp.eq.s32.totalorder %s36, 1
      %p204 = por %p202, %p203
      %p205 = scmp.ne.s32.totalorder %s197, %s200
      %p206 = scmp.eq.s32.totalorder %s36, 0
      %p207 = por %p205, %p206
      %p208 = scmp.ne.s32.totalorder %s197, %s200
      %p209 = scmp.eq.s32.totalorder %s41, 1
      %p210 = por %p208, %p209
      %p211 = scmp.ne.s32.totalorder %s200, %s201
      %p212 = scmp.eq.s32.totalorder %s41, 0
      %p213 = por %p211, %p212
      %p214 = scmp.ne.s32.totalorder %s200, %s201
      %p215 = scmp.eq.s32.totalorder %s42, 1
      %p216 = por %p214, %p215
      %p218 = scmp.ne.s32.totalorder %s201, %s217
      %p219 = scmp.eq.s32.totalorder %s42, 0
      %p220 = por %p218, %p219
      %s221 = ssub.s32 %s36, %s43
      %p222 = scmp.eq.s32.totalorder %s221, 0
      %s224 = sadd.s32 %s223, 1
      %s225 = scalar_select %p222, %s223, %s224
      %p228 = pneg %p222
      %p229 = scmp.eq.s32.totalorder %s36, 1
      %p230 = por %p228, %p229
      %p231 = scmp.ne.s32.totalorder %s223, %s226
      %p232 = scmp.eq.s32.totalorder %s36, 0
      %p233 = por %p231, %p232
      %p234 = scmp.ne.s32.totalorder %s223, %s226
      %p235 = scmp.eq.s32.totalorder %s41, 1
      %p236 = por %p234, %p235
      %p237 = scmp.ne.s32.totalorder %s226, %s227
      %p238 = scmp.eq.s32.totalorder %s41, 0
      %p239 = por %p237, %p238
      %p240 = scmp.ne.s32.totalorder %s226, %s227
      %p241 = scmp.eq.s32.totalorder %s42, 1
      %p242 = por %p240, %p241
      %p244 = scmp.ne.s32.totalorder %s227, %s243
      %p245 = scmp.eq.s32.totalorder %s42, 0
      %p246 = por %p244, %p245
      %s247 = ssub.s32 %s36, %s43
      %p248 = scmp.eq.s32.totalorder %s247, 0
      %s250 = sadd.s32 %s249, 1
      %s251 = scalar_select %p248, %s249, %s250
      %p254 = pneg %p248
      %p255 = scmp.eq.s32.totalorder %s36, 1
      %p256 = por %p254, %p255
      %p257 = scmp.ne.s32.totalorder %s249, %s252
      %p258 = scmp.eq.s32.totalorder %s36, 0
      %p259 = por %p257, %p258
      %p260 = scmp.ne.s32.totalorder %s249, %s252
      %p261 = scmp.eq.s32.totalorder %s41, 1
      %p262 = por %p260, %p261
      %p263 = scmp.ne.s32.totalorder %s252, %s253
      %p264 = scmp.eq.s32.totalorder %s41, 0
      %p265 = por %p263, %p264
      %p266 = scmp.ne.s32.totalorder %s252, %s253
      %p267 = scmp.eq.s32.totalorder %s42, 1
      %p268 = por %p266, %p267
      %p270 = scmp.ne.s32.totalorder %s253, %s269
      %p271 = scmp.eq.s32.totalorder %s42, 0
      %p272 = por %p270, %p271
      %s273 = ssub.s32 %s36, %s43
      %p274 = scmp.eq.s32.totalorder %s273, 0
      %s276 = sadd.s32 %s275, 1
      %s277 = scalar_select %p274, %s275, %s276
      %p280 = pneg %p274
      %p281 = scmp.eq.s32.totalorder %s36, 1
      %p282 = por %p280, %p281
      %p283 = scmp.ne.s32.totalorder %s275, %s278
      %p284 = scmp.eq.s32.totalorder %s36, 0
      %p285 = por %p283, %p284
      %p286 = scmp.ne.s32.totalorder %s275, %s278
      %p287 = scmp.eq.s32.totalorder %s41, 1
      %p288 = por %p286, %p287
      %p289 = scmp.ne.s32.totalorder %s278, %s279
      %p290 = scmp.eq.s32.totalorder %s41, 0
      %p291 = por %p289, %p290
      %p292 = scmp.ne.s32.totalorder %s278, %s279
      %p293 = scmp.eq.s32.totalorder %s42, 1
      %p294 = por %p292, %p293
      %p296 = scmp.ne.s32.totalorder %s279, %s295
      %p297 = scmp.eq.s32.totalorder %s42, 0
      %p298 = por %p296, %p297
      %s299 = ssub.s32 %s36, %s43
      %p300 = scmp.eq.s32.totalorder %s299, 0
      %s302 = sadd.s32 %s301, 1
      %s303 = scalar_select %p300, %s301, %s302
      %p306 = pneg %p300
      %p307 = scmp.eq.s32.totalorder %s36, 1
      %p308 = por %p306, %p307
      %p309 = scmp.ne.s32.totalorder %s301, %s304
      %p310 = scmp.eq.s32.totalorder %s36, 0
      %p311 = por %p309, %p310
      %p312 = scmp.ne.s32.totalorder %s301, %s304
      %p313 = scmp.eq.s32.totalorder %s41, 1
      %p314 = por %p312, %p313
      %p315 = scmp.ne.s32.totalorder %s304, %s305
      %p316 = scmp.eq.s32.totalorder %s41, 0
      %p317 = por %p315, %p316
      %p318 = scmp.ne.s32.totalorder %s304, %s305
      %p319 = scmp.eq.s32.totalorder %s42, 1
      %p320 = por %p318, %p319
      %p322 = scmp.ne.s32.totalorder %s305, %s321
      %p323 = scmp.eq.s32.totalorder %s42, 0
      %p324 = por %p322, %p323
      %s325 = ssub.s32 %s36, %s43
      %p326 = scmp.eq.s32.totalorder %s325, 0
      %s328 = sadd.s32 %s327, 1
      %s329 = scalar_select %p326, %s327, %s328
      %p332 = pneg %p326
      %p333 = scmp.eq.s32.totalorder %s36, 1
      %p334 = por %p332, %p333
      %p335 = scmp.ne.s32.totalorder %s327, %s330
      %p336 = scmp.eq.s32.totalorder %s36, 0
      %p337 = por %p335, %p336
      %p338 = scmp.ne.s32.totalorder %s327, %s330
      %p339 = scmp.eq.s32.totalorder %s41, 1
      %p340 = por %p338, %p339
      %p341 = scmp.ne.s32.totalorder %s330, %s331
      %p342 = scmp.eq.s32.totalorder %s41, 0
      %p343 = por %p341, %p342
      %p344 = scmp.ne.s32.totalorder %s330, %s331
      %p345 = scmp.eq.s32.totalorder %s42, 1
      %p346 = por %p344, %p345
      %p348 = scmp.ne.s32.totalorder %s331, %s347
      %p349 = scmp.eq.s32.totalorder %s42, 0
      %p350 = por %p348, %p349
      %s351 = ssub.s32 %s36, %s43
      %p352 = scmp.eq.s32.totalorder %s351, 0
      %s354 = sadd.s32 %s353, 1
      %s355 = scalar_select %p352, %s353, %s354
      %p358 = pneg %p352
      %p359 = scmp.eq.s32.totalorder %s36, 1
      %p360 = por %p358, %p359
      %p361 = scmp.ne.s32.totalorder %s353, %s356
      %p362 = scmp.eq.s32.totalorder %s36, 0
      %p363 = por %p361, %p362
      %p364 = scmp.ne.s32.totalorder %s353, %s356
      %p365 = scmp.eq.s32.totalorder %s41, 1
      %p366 = por %p364, %p365
      %p367 = scmp.ne.s32.totalorder %s356, %s357
      %p368 = scmp.eq.s32.totalorder %s41, 0
      %p369 = por %p367, %p368
      %p370 = scmp.ne.s32.totalorder %s356, %s357
      %p371 = scmp.eq.s32.totalorder %s42, 1
      %p372 = por %p370, %p371
      %p374 = scmp.ne.s32.totalorder %s357, %s373
      %p375 = scmp.eq.s32.totalorder %s42, 0
      %p376 = por %p374, %p375
      %s377 = ssub.s32 %s36, %s43
      %p378 = scmp.eq.s32.totalorder %s377, 0
      %s380 = sadd.s32 %s379, 1
      %s381 = scalar_select %p378, %s379, %s380
      %p384 = pneg %p378
      %p385 = scmp.eq.s32.totalorder %s36, 1
      %p386 = por %p384, %p385
      %p387 = scmp.ne.s32.totalorder %s379, %s382
      %p388 = scmp.eq.s32.totalorder %s36, 0
      %p389 = por %p387, %p388
      %p390 = scmp.ne.s32.totalorder %s379, %s382
      %p391 = scmp.eq.s32.totalorder %s41, 1
      %p392 = por %p390, %p391
      %p393 = scmp.ne.s32.totalorder %s382, %s383
      %p394 = scmp.eq.s32.totalorder %s41, 0
      %p395 = por %p393, %p394
      %p396 = scmp.ne.s32.totalorder %s382, %s383
      %p397 = scmp.eq.s32.totalorder %s42, 1
      %p398 = por %p396, %p397
      %p400 = scmp.ne.s32.totalorder %s383, %s399
      %p401 = scmp.eq.s32.totalorder %s42, 0
      %p402 = por %p400, %p401
      %s403 = ssub.s32 %s36, %s43
      %p404 = scmp.eq.s32.totalorder %s403, 0
      %s406 = sadd.s32 %s405, 1
      %s407 = scalar_select %p404, %s405, %s406
      %p410 = pneg %p404
      %p411 = scmp.eq.s32.totalorder %s36, 1
      %p412 = por %p410, %p411
      %p413 = scmp.ne.s32.totalorder %s405, %s408
      %p414 = scmp.eq.s32.totalorder %s36, 0
      %p415 = por %p413, %p414
      %p416 = scmp.ne.s32.totalorder %s405, %s408
      %p417 = scmp.eq.s32.totalorder %s41, 1
      %p418 = por %p416, %p417
      %p419 = scmp.ne.s32.totalorder %s408, %s409
      %p420 = scmp.eq.s32.totalorder %s41, 0
      %p421 = por %p419, %p420
      %p422 = scmp.ne.s32.totalorder %s408, %s409
      %p423 = scmp.eq.s32.totalorder %s42, 1
      %p424 = por %p422, %p423
      %p426 = scmp.ne.s32.totalorder %s409, %s425
      %p427 = scmp.eq.s32.totalorder %s42, 0
      %p428 = por %p426, %p427
      %s429 = ssub.s32 %s36, %s43
      %p430 = scmp.eq.s32.totalorder %s429, 0
      %s432 = sadd.s32 %s431, 1
      %s433 = scalar_select %p430, %s431, %s432
      %p436 = pneg %p430
      %p437 = scmp.eq.s32.totalorder %s36, 1
      %p438 = por %p436, %p437
      %p439 = scmp.ne.s32.totalorder %s431, %s434
      %p440 = scmp.eq.s32.totalorder %s36, 0
      %p441 = por %p439, %p440
      %p442 = scmp.ne.s32.totalorder %s431, %s434
      %p443 = scmp.eq.s32.totalorder %s41, 1
      %p444 = por %p442, %p443
      %p445 = scmp.ne.s32.totalorder %s434, %s435
      %p446 = scmp.eq.s32.totalorder %s41, 0
      %p447 = por %p445, %p446
      %p448 = scmp.ne.s32.totalorder %s434, %s435
      %p449 = scmp.eq.s32.totalorder %s42, 1
      %p450 = por %p448, %p449
      %p452 = scmp.ne.s32.totalorder %s435, %s451
      %p453 = scmp.eq.s32.totalorder %s42, 0
      %p454 = por %p452, %p453
      %s455 = ssub.s32 %s36, %s43
      %p456 = scmp.eq.s32.totalorder %s455, 0
      %s458 = sadd.s32 %s457, 1
      %s459 = scalar_select %p456, %s457, %s458
      %p462 = pneg %p456
      %p463 = scmp.eq.s32.totalorder %s36, 1
      %p464 = por %p462, %p463
      %p465 = scmp.ne.s32.totalorder %s457, %s460
      %p466 = scmp.eq.s32.totalorder %s36, 0
      %p467 = por %p465, %p466
      %p468 = scmp.ne.s32.totalorder %s457, %s460
      %p469 = scmp.eq.s32.totalorder %s41, 1
      %p470 = por %p468, %p469
      %p471 = scmp.ne.s32.totalorder %s460, %s461
      %p472 = scmp.eq.s32.totalorder %s41, 0
      %p473 = por %p471, %p472
      %p474 = scmp.ne.s32.totalorder %s460, %s461
      %p475 = scmp.eq.s32.totalorder %s42, 1
      %p476 = por %p474, %p475
      %p478 = scmp.ne.s32.totalorder %s461, %s477
      %p479 = scmp.eq.s32.totalorder %s42, 0
      %p480 = por %p478, %p479
      %s482 = sadd.s32 %s481, 1
      %p485 = scmp.eq.s32.totalorder %s36, 1
      %p486 = scmp.ne.s32.totalorder %s481, %s483
      %p487 = scmp.eq.s32.totalorder %s36, 0
      %p488 = por %p486, %p487
      %p489 = scmp.ne.s32.totalorder %s481, %s483
      %p490 = scmp.eq.s32.totalorder %s41, 1
      %p491 = por %p489, %p490
      %p492 = scmp.ne.s32.totalorder %s483, %s484
      %p493 = scmp.eq.s32.totalorder %s41, 0
      %p494 = por %p492, %p493
      %p495 = scmp.ne.s32.totalorder %s483, %s484
      %p496 = scmp.eq.s32.totalorder %s42, 1
      %p497 = por %p495, %p496
      %p499 = scmp.ne.s32.totalorder %s484, %s498
      %p500 = scmp.eq.s32.totalorder %s42, 0
      %p501 = por %p499, %p500
      %s503 = sadd.s32 %s502, 1
      %p506 = scmp.eq.s32.totalorder %s36, 1
      %p507 = scmp.ne.s32.totalorder %s502, %s504
      %p508 = scmp.eq.s32.totalorder %s36, 0
      %p509 = por %p507, %p508
      %p510 = scmp.ne.s32.totalorder %s502, %s504
      %p511 = scmp.eq.s32.totalorder %s41, 1
      %p512 = por %p510, %p511
      %p513 = scmp.ne.s32.totalorder %s504, %s505
      %p514 = scmp.eq.s32.totalorder %s41, 0
      %p515 = por %p513, %p514
      %p516 = scmp.ne.s32.totalorder %s504, %s505
      %p517 = scmp.eq.s32.totalorder %s42, 1
      %p518 = por %p516, %p517
      %p520 = scmp.ne.s32.totalorder %s505, %s519
      %p521 = scmp.eq.s32.totalorder %s42, 0
      %p522 = por %p520, %p521
      %s524 = sadd.s32 %s523, 1
      %p527 = scmp.eq.s32.totalorder %s36, 1
      %p528 = scmp.ne.s32.totalorder %s523, %s525
      %p529 = scmp.eq.s32.totalorder %s36, 0
      %p530 = por %p528, %p529
      %p531 = scmp.ne.s32.totalorder %s523, %s525
      %p532 = scmp.eq.s32.totalorder %s41, 1
      %p533 = por %p531, %p532
      %p534 = scmp.ne.s32.totalorder %s525, %s526
      %p535 = scmp.eq.s32.totalorder %s41, 0
      %p536 = por %p534, %p535
      %p537 = scmp.ne.s32.totalorder %s525, %s526
      %p538 = scmp.eq.s32.totalorder %s42, 1
      %p539 = por %p537, %p538
      %p541 = scmp.ne.s32.totalorder %s526, %s540
      %p542 = scmp.eq.s32.totalorder %s42, 0
      %p543 = por %p541, %p542
      %p544 = scmp.le.s32.totalorder 1, %s36
      %p545 = scmp.lt.s32.totalorder %s36, 3
      %p546 = pnand %p544, %p545
      %p547 = pneg %p546
      // Predicated region
      $region9: #{tpu_custom_call.1} parent=5 // pred_check
        _
      $region10: #{tpu_custom_call.1} parent=5 // pred_check_branch
        %549 = sbr.rel (%p546) target = $region12
      $region11: #{tpu_custom_call.1} parent=5 // pred_region
        %s550 = ssub.s32 %s36, 1
        // Predicated region
        $region13: #{tpu_custom_call.1} parent=11 // pred_check
          %p551 = pneg %p57
        $region14: #{tpu_custom_call.1} parent=11 // pred_check_branch
          %553 = sbr.rel (%p551) target = $region16
        $region15: #{tpu_custom_call.1} parent=11 // pred_region
          %555 = vsyncadd [#allocation4], 0
          %s556 = sshll.u32 %s0, 4
          %s557 = int_to_ptr.hbm [resolvable:$true] %s556
          %s558 = sshll.u32 [#allocation3], 4
          %s559 = int_to_ptr.vmem [resolvable:$true] %s558
          %564 = dma.hbm_to_vmem [thread:$0]  %s557, 256, %s559, [#allocation4], 128, 128, 8
        $region16: #{tpu_custom_call.1} parent=11 // pred_fallthru
          _
        // Predicated region
        $region17: #{tpu_custom_call.1} parent=11 // pred_check
          %p565 = pneg %p494
        $region18: #{tpu_custom_call.1} parent=11 // pred_check_branch
          %567 = sbr.rel (%p565) target = $region20
        $region19: #{tpu_custom_call.1} parent=11 // pred_region
          _
        $region20: #{tpu_custom_call.1} parent=11 // pred_fallthru
          _
        // Predicated region
        $region21: #{tpu_custom_call.1} parent=11 // pred_check
          %p568 = pneg %p515
        $region22: #{tpu_custom_call.1} parent=11 // pred_check_branch
          %570 = sbr.rel (%p568) target = $region24
        $region23: #{tpu_custom_call.1} parent=11 // pred_region
          _
        $region24: #{tpu_custom_call.1} parent=11 // pred_fallthru
          _
      $region12: #{tpu_custom_call.1} parent=5 // pred_fallthru
        _
      %p571 = scmp.lt.s32.totalorder %s36, 2
      // Predicated region
      $region25: #{tpu_custom_call.1} parent=5 // pred_check
        %p572 = pneg %p571
      $region26: #{tpu_custom_call.1} parent=5 // pred_check_branch
        %574 = sbr.rel (%p572) target = $region28
      $region27: #{tpu_custom_call.1} parent=5 // pred_region
        // Predicated region
        $region29: #{tpu_custom_call.1} parent=27 // pred_check
          %p575 = pneg %p77
        $region30: #{tpu_custom_call.1} parent=27 // pred_check_branch
          %577 = sbr.rel (%p575) target = $region32
        $region31: #{tpu_custom_call.1} parent=27 // pred_region
          %s578 = sand.u32 %s36, 1
          %s579 = scalar_lea.sflag [#allocation7], %s578
          %s580 = sand.u32 %s67, 1
          %s581 = scalar_lea.vmem [#allocation6], %s580
          %583 = vsyncadd %s579, 0
          %s584 = scalar_lea.hbm %s1, %s36
          %s586 = sshll.u32 %s584, 4
          %s587 = int_to_ptr.hbm [resolvable:$true] %s586
          %s588 = sshll.u32 %s581, 4
          %s589 = int_to_ptr.vmem [resolvable:$true] %s588
          %591 = dma.hbm_to_vmem [thread:$0]  %s587, 16, %s589, %s579
        $region32: #{tpu_custom_call.1} parent=27 // pred_fallthru
          _
        // Predicated region
        $region33: #{tpu_custom_call.1} parent=27 // pred_check
          %p592 = pneg %p103
        $region34: #{tpu_custom_call.1} parent=27 // pred_check_branch
          %594 = sbr.rel (%p592) target = $region36
        $region35: #{tpu_custom_call.1} parent=27 // pred_region
          %s595 = sand.u32 %s36, 1
          %s596 = scalar_lea.sflag [#allocation7], %s595
          %s597 = sand.u32 %s93, 1
          %s598 = scalar_lea.vmem [#allocation8], %s597
          %600 = vsyncadd %s596, 0
          %s601 = scalar_lea.hbm %s2, %s36
          %s603 = sshll.u32 %s601, 4
          %s604 = int_to_ptr.hbm [resolvable:$true] %s603
          %s605 = sshll.u32 %s598, 4
          %s606 = int_to_ptr.vmem [resolvable:$true] %s605
          %608 = dma.hbm_to_vmem [thread:$0]  %s604, 16, %s606, %s596
        $region36: #{tpu_custom_call.1} parent=27 // pred_fallthru
          _
        // Predicated region
        $region37: #{tpu_custom_call.1} parent=27 // pred_check
          %p609 = pneg %p129
        $region38: #{tpu_custom_call.1} parent=27 // pred_check_branch
          %611 = sbr.rel (%p609) target = $region40
        $region39: #{tpu_custom_call.1} parent=27 // pred_region
          %p612 = scmp.lt.s32.totalorder %s36, 1
          %s613 = scalar_select %p612, %s36, 1
          %s614 = smul.addr %s613, 4
          %s615 = smul.addr %s614, 8
          %s616 = scalar_lea.vmem %s3, %s615
        $region40: #{tpu_custom_call.1} parent=27 // pred_fallthru
          _
        // Predicated region
        $region41: #{tpu_custom_call.1} parent=27 // pred_check
          %p617 = pneg %p155
        $region42: #{tpu_custom_call.1} parent=27 // pred_check_branch
          %619 = sbr.rel (%p617) target = $region44
        $region43: #{tpu_custom_call.1} parent=27 // pred_region
          %p620 = scmp.lt.s32.totalorder %s36, 1
          %s621 = scalar_select %p620, %s36, 1
          %s622 = scalar_lea.vmem %s4, %s621
        $region44: #{tpu_custom_call.1} parent=27 // pred_fallthru
          _
        // Predicated region
        $region45: #{tpu_custom_call.1} parent=27 // pred_check
          %p623 = pneg %p181
        $region46: #{tpu_custom_call.1} parent=27 // pred_check_branch
          %625 = sbr.rel (%p623) target = $region48
        $region47: #{tpu_custom_call.1} parent=27 // pred_region
          %p626 = scmp.lt.s32.totalorder %s36, 1
          %s627 = scalar_select %p626, %s36, 1
          %s628 = smul.addr %s627, 4
          %s629 = smul.addr %s628, 8
          %s630 = scalar_lea.vmem %s5, %s629
        $region48: #{tpu_custom_call.1} parent=27 // pred_fallthru
          _
        // Predicated region
        $region49: #{tpu_custom_call.1} parent=27 // pred_check
          %p631 = pneg %p207
        $region50: #{tpu_custom_call.1} parent=27 // pred_check_branch
          %633 = sbr.rel (%p631) target = $region52
        $region51: #{tpu_custom_call.1} parent=27 // pred_region
          %p634 = scmp.lt.s32.totalorder %s36, 1
          %s635 = scalar_select %p634, %s36, 1
          %s636 = scalar_lea.vmem %s6, %s635
        $region52: #{tpu_custom_call.1} parent=27 // pred_fallthru
          _
        // Predicated region
        $region53: #{tpu_custom_call.1} parent=27 // pred_check
          %p637 = pneg %p233
        $region54: #{tpu_custom_call.1} parent=27 // pred_check_branch
          %639 = sbr.rel (%p637) target = $region56
        $region55: #{tpu_custom_call.1} parent=27 // pred_region
          %p640 = scmp.lt.s32.totalorder %s36, 1
          %s641 = scalar_select %p640, %s36, 1
          %s642 = smul.addr %s641, 4
          %s643 = smul.addr %s642, 8
          %s644 = scalar_lea.vmem %s7, %s643
        $region56: #{tpu_custom_call.1} parent=27 // pred_fallthru
          _
        // Predicated region
        $region57: #{tpu_custom_call.1} parent=27 // pred_check
          %p645 = pneg %p259
        $region58: #{tpu_custom_call.1} parent=27 // pred_check_branch
          %647 = sbr.rel (%p645) target = $region60
        $region59: #{tpu_custom_call.1} parent=27 // pred_region
          %s648 = sand.u32 %s36, 1
          %s649 = scalar_lea.sflag [#allocation10], %s648
          %s650 = sand.u32 %s249, 1
          %s651 = scalar_lea.vmem [#allocation9], %s650
          %653 = vsyncadd %s649, 0
          %s654 = scalar_lea.hbm %s8, %s36
          %s656 = sshll.u32 %s654, 4
          %s657 = int_to_ptr.hbm [resolvable:$true] %s656
          %s658 = sshll.u32 %s651, 4
          %s659 = int_to_ptr.vmem [resolvable:$true] %s658
          %661 = dma.hbm_to_vmem [thread:$0]  %s657, 16, %s659, %s649
        $region60: #{tpu_custom_call.1} parent=27 // pred_fallthru
          _
        // Predicated region
        $region61: #{tpu_custom_call.1} parent=27 // pred_check
          %p662 = pneg %p285
        $region62: #{tpu_custom_call.1} parent=27 // pred_check_branch
          %664 = sbr.rel (%p662) target = $region64
        $region63: #{tpu_custom_call.1} parent=27 // pred_region
          %s665 = sand.u32 %s36, 1
          %s666 = scalar_lea.sflag [#allocation10], %s665
          %s667 = sand.u32 %s275, 1
          %s668 = smul.addr %s667, 32
          %s669 = scalar_lea.vmem [#allocation11], %s668
          %671 = vsyncadd %s666, 0
          %s672 = smul.addr %s36, 4
          %s673 = smul.addr %s672, 8
          %s674 = scalar_lea.hbm %s9, %s673
          %s675 = sshll.u32 %s674, 4
          %s676 = int_to_ptr.hbm [resolvable:$true] %s675
          %s677 = sshll.u32 %s669, 4
          %s678 = int_to_ptr.vmem [resolvable:$true] %s677
          %683 = dma.hbm_to_vmem [thread:$0]  %s676, 512, %s678, %s666, 128, 128, 8
        $region64: #{tpu_custom_call.1} parent=27 // pred_fallthru
          _
        // Predicated region
        $region65: #{tpu_custom_call.1} parent=27 // pred_check
          %p684 = pneg %p311
        $region66: #{tpu_custom_call.1} parent=27 // pred_check_branch
          %686 = sbr.rel (%p684) target = $region68
        $region67: #{tpu_custom_call.1} parent=27 // pred_region
          %p687 = scmp.lt.s32.totalorder %s36, 1
          %s688 = scalar_select %p687, %s36, 1
          %s689 = scalar_lea.vmem %s10, %s688
        $region68: #{tpu_custom_call.1} parent=27 // pred_fallthru
          _
        // Predicated region
        $region69: #{tpu_custom_call.1} parent=27 // pred_check
          %p690 = pneg %p337
        $region70: #{tpu_custom_call.1} parent=27 // pred_check_branch
          %692 = sbr.rel (%p690) target = $region72
        $region71: #{tpu_custom_call.1} parent=27 // pred_region
          %p693 = scmp.lt.s32.totalorder %s36, 1
          %s694 = scalar_select %p693, %s36, 1
          %s695 = scalar_lea.vmem %s11, %s694
        $region72: #{tpu_custom_call.1} parent=27 // pred_fallthru
          _
        // Predicated region
        $region73: #{tpu_custom_call.1} parent=27 // pred_check
          %p696 = pneg %p363
        $region74: #{tpu_custom_call.1} parent=27 // pred_check_branch
          %698 = sbr.rel (%p696) target = $region76
        $region75: #{tpu_custom_call.1} parent=27 // pred_region
          %p699 = scmp.lt.s32.totalorder %s36, 1
          %s700 = scalar_select %p699, %s36, 1
          %s701 = scalar_lea.vmem %s12, %s700
        $region76: #{tpu_custom_call.1} parent=27 // pred_fallthru
          _
        // Predicated region
        $region77: #{tpu_custom_call.1} parent=27 // pred_check
          %p702 = pneg %p389
        $region78: #{tpu_custom_call.1} parent=27 // pred_check_branch
          %704 = sbr.rel (%p702) target = $region80
        $region79: #{tpu_custom_call.1} parent=27 // pred_region
          %s705 = sand.u32 %s36, 1
          %s706 = scalar_lea.sflag [#allocation13], %s705
          %s707 = sand.u32 %s379, 1
          %s708 = smul.addr %s707, 32
          %s709 = scalar_lea.vmem [#allocation12], %s708
          %711 = vsyncadd %s706, 0
          %s712 = smul.addr %s36, 4
          %s713 = smul.addr %s712, 8
          %s714 = scalar_lea.hbm %s13, %s713
          %s715 = sshll.u32 %s714, 4
          %s716 = int_to_ptr.hbm [resolvable:$true] %s715
          %s717 = sshll.u32 %s709, 4
          %s718 = int_to_ptr.vmem [resolvable:$true] %s717
          %723 = dma.hbm_to_vmem [thread:$0]  %s716, 512, %s718, %s706, 128, 128, 8
        $region80: #{tpu_custom_call.1} parent=27 // pred_fallthru
          _
        // Predicated region
        $region81: #{tpu_custom_call.1} parent=27 // pred_check
          %p724 = pneg %p415
        $region82: #{tpu_custom_call.1} parent=27 // pred_check_branch
          %726 = sbr.rel (%p724) target = $region84
        $region83: #{tpu_custom_call.1} parent=27 // pred_region
          %s727 = sand.u32 %s36, 1
          %s728 = scalar_lea.sflag [#allocation13], %s727
          %s729 = sand.u32 %s405, 1
          %s730 = scalar_lea.vmem [#allocation14], %s729
          %732 = vsyncadd %s728, 0
          %s733 = scalar_lea.hbm %s14, %s36
          %s735 = sshll.u32 %s733, 4
          %s736 = int_to_ptr.hbm [resolvable:$true] %s735
          %s737 = sshll.u32 %s730, 4
          %s738 = int_to_ptr.vmem [resolvable:$true] %s737
          %740 = dma.hbm_to_vmem [thread:$0]  %s736, 16, %s738, %s728
        $region84: #{tpu_custom_call.1} parent=27 // pred_fallthru
          _
        // Predicated region
        $region85: #{tpu_custom_call.1} parent=27 // pred_check
          %p741 = pneg %p441
        $region86: #{tpu_custom_call.1} parent=27 // pred_check_branch
          %743 = sbr.rel (%p741) target = $region88
        $region87: #{tpu_custom_call.1} parent=27 // pred_region
          %p744 = scmp.lt.s32.totalorder %s36, 1
          %s745 = scalar_select %p744, %s36, 1
          %s746 = smul.addr %s745, 8
          %s747 = smul.addr %s746, 8
          %s748 = scalar_lea.vmem %s15, %s747
        $region88: #{tpu_custom_call.1} parent=27 // pred_fallthru
          _
        // Predicated region
        $region89: #{tpu_custom_call.1} parent=27 // pred_check
          %p749 = pneg %p467
        $region90: #{tpu_custom_call.1} parent=27 // pred_check_branch
          %751 = sbr.rel (%p749) target = $region92
        $region91: #{tpu_custom_call.1} parent=27 // pred_region
          %p752 = scmp.lt.s32.totalorder %s36, 1
          %s753 = scalar_select %p752, %s36, 1
          %s754 = scalar_lea.vmem %s16, %s753
        $region92: #{tpu_custom_call.1} parent=27 // pred_fallthru
          _
      $region28: #{tpu_custom_call.1} parent=5 // pred_fallthru
        _
      %p755 = scmp.le.s32.totalorder 1, %s36
      %p756 = scmp.lt.s32.totalorder %s36, 3
      %p757 = pnand %p755, %p756
      %p758 = pneg %p757
      // Predicated region
      $region93: #{tpu_custom_call.1} parent=5 // pred_check
        _
      $region94: #{tpu_custom_call.1} parent=5 // pred_check_branch
        %760 = sbr.rel (%p757) target = $region96
      $region95: #{tpu_custom_call.1} parent=5 // pred_region
        %s761 = ssub.s32 %s36, 1
        // Predicated region
        $region97: #{tpu_custom_call.1} parent=95 // pred_check
          %p762 = pneg %p57
        $region98: #{tpu_custom_call.1} parent=95 // pred_check_branch
          %764 = sbr.rel (%p762) target = $region100
        $region99: #{tpu_custom_call.1} parent=95 // pred_region
          %766 = dma.done [#allocation4], 256
        $region100: #{tpu_custom_call.1} parent=95 // pred_fallthru
          _
        %s767 = sand.u32 %s41, 1
        %s768 = scalar_lea.sflag [#allocation7], %s767
        %s769 = sand.u32 %s70, 1
        %s770 = scalar_lea.vmem [#allocation6], %s769
        // Predicated region
        $region101: #{tpu_custom_call.1} parent=95 // pred_check
          %p771 = pneg %p83
        $region102: #{tpu_custom_call.1} parent=95 // pred_check_branch
          %773 = sbr.rel (%p771) target = $region104
        $region103: #{tpu_custom_call.1} parent=95 // pred_region
          %775 = dma.done %s768, 16
        $region104: #{tpu_custom_call.1} parent=95 // pred_fallthru
          _
        %s776 = sand.u32 %s41, 1
        %s777 = scalar_lea.sflag [#allocation7], %s776
        %s778 = sand.u32 %s96, 1
        %s779 = scalar_lea.vmem [#allocation8], %s778
        // Predicated region
        $region105: #{tpu_custom_call.1} parent=95 // pred_check
          %p780 = pneg %p109
        $region106: #{tpu_custom_call.1} parent=95 // pred_check_branch
          %782 = sbr.rel (%p780) target = $region108
        $region107: #{tpu_custom_call.1} parent=95 // pred_region
          %784 = dma.done %s777, 16
        $region108: #{tpu_custom_call.1} parent=95 // pred_fallthru
          _
        %s785 = sand.u32 %s41, 1
        %s786 = scalar_lea.sflag [#allocation10], %s785
        %s787 = sand.u32 %s252, 1
        %s788 = scalar_lea.vmem [#allocation9], %s787
        // Predicated region
        $region109: #{tpu_custom_call.1} parent=95 // pred_check
          %p789 = pneg %p265
        $region110: #{tpu_custom_call.1} parent=95 // pred_check_branch
          %791 = sbr.rel (%p789) target = $region112
        $region111: #{tpu_custom_call.1} parent=95 // pred_region
          %793 = dma.done %s786, 16
        $region112: #{tpu_custom_call.1} parent=95 // pred_fallthru
          _
        %s794 = sand.u32 %s41, 1
        %s795 = scalar_lea.sflag [#allocation10], %s794
        %s796 = sand.u32 %s278, 1
        %s797 = smul.addr %s796, 32
        %s798 = scalar_lea.vmem [#allocation11], %s797
        // Predicated region
        $region113: #{tpu_custom_call.1} parent=95 // pred_check
          %p799 = pneg %p291
        $region114: #{tpu_custom_call.1} parent=95 // pred_check_branch
          %801 = sbr.rel (%p799) target = $region116
        $region115: #{tpu_custom_call.1} parent=95 // pred_region
          %803 = dma.done %s795, 512
        $region116: #{tpu_custom_call.1} parent=95 // pred_fallthru
          _
        %s804 = sand.u32 %s41, 1
        %s805 = scalar_lea.sflag [#allocation13], %s804
        %s806 = sand.u32 %s382, 1
        %s807 = smul.addr %s806, 32
        %s808 = scalar_lea.vmem [#allocation12], %s807
        // Predicated region
        $region117: #{tpu_custom_call.1} parent=95 // pred_check
          %p809 = pneg %p395
        $region118: #{tpu_custom_call.1} parent=95 // pred_check_branch
          %811 = sbr.rel (%p809) target = $region120
        $region119: #{tpu_custom_call.1} parent=95 // pred_region
          %813 = dma.done %s805, 512
        $region120: #{tpu_custom_call.1} parent=95 // pred_fallthru
          _
        %s814 = sand.u32 %s41, 1
        %s815 = scalar_lea.sflag [#allocation13], %s814
        %s816 = sand.u32 %s408, 1
        %s817 = scalar_lea.vmem [#allocation14], %s816
        // Predicated region
        $region121: #{tpu_custom_call.1} parent=95 // pred_check
          %p818 = pneg %p421
        $region122: #{tpu_custom_call.1} parent=95 // pred_check_branch
          %820 = sbr.rel (%p818) target = $region124
        $region123: #{tpu_custom_call.1} parent=95 // pred_region
          %822 = dma.done %s815, 16
        $region124: #{tpu_custom_call.1} parent=95 // pred_fallthru
          _
        %p823 = pneg %p57
        %p824 = pneg %p54
        %s825 = sand.u32 %s41, 1
        %s826 = scalar_lea.sflag [#allocation7], %s825
        %s827 = sand.u32 %s70, 1
        %s828 = scalar_lea.vmem [#allocation6], %s827
        %p829 = pneg %p83
        %p830 = pneg %p80
        %s831 = sand.u32 %s41, 1
        %s832 = scalar_lea.sflag [#allocation7], %s831
        %s833 = sand.u32 %s96, 1
        %s834 = scalar_lea.vmem [#allocation8], %s833
        %p835 = pneg %p109
        %p836 = pneg %p106
        %p837 = scmp.lt.s32.totalorder %s41, 1
        %s838 = scalar_select %p837, %s41, 1
        %s839 = smul.addr %s838, 4
        %s840 = smul.addr %s839, 8
        %s841 = scalar_lea.vmem %s3, %s840
        %p842 = pneg %p135
        %p843 = pneg %p132
        %p844 = scmp.lt.s32.totalorder %s41, 1
        %s845 = scalar_select %p844, %s41, 1
        %s846 = scalar_lea.vmem %s4, %s845
        %p847 = pneg %p161
        %p848 = pneg %p158
        %p849 = scmp.lt.s32.totalorder %s41, 1
        %s850 = scalar_select %p849, %s41, 1
        %s851 = smul.addr %s850, 4
        %s852 = smul.addr %s851, 8
        %s853 = scalar_lea.vmem %s5, %s852
        %p854 = pneg %p187
        %p855 = pneg %p184
        %p856 = scmp.lt.s32.totalorder %s41, 1
        %s857 = scalar_select %p856, %s41, 1
        %s858 = scalar_lea.vmem %s6, %s857
        %p859 = pneg %p213
        %p860 = pneg %p210
        %p861 = scmp.lt.s32.totalorder %s41, 1
        %s862 = scalar_select %p861, %s41, 1
        %s863 = smul.addr %s862, 4
        %s864 = smul.addr %s863, 8
        %s865 = scalar_lea.vmem %s7, %s864
        %p866 = pneg %p239
        %p867 = pneg %p236
        %s868 = sand.u32 %s41, 1
        %s869 = scalar_lea.sflag [#allocation10], %s868
        %s870 = sand.u32 %s252, 1
        %s871 = scalar_lea.vmem [#allocation9], %s870
        %p872 = pneg %p265
        %p873 = pneg %p262
        %s874 = sand.u32 %s41, 1
        %s875 = scalar_lea.sflag [#allocation10], %s874
        %s876 = sand.u32 %s278, 1
        %s877 = smul.addr %s876, 32
        %s878 = scalar_lea.vmem [#allocation11], %s877
        %p879 = pneg %p291
        %p880 = pneg %p288
        %p881 = scmp.lt.s32.totalorder %s41, 1
        %s882 = scalar_select %p881, %s41, 1
        %s883 = scalar_lea.vmem %s10, %s882
        %p884 = pneg %p317
        %p885 = pneg %p314
        %p886 = scmp.lt.s32.totalorder %s41, 1
        %s887 = scalar_select %p886, %s41, 1
        %s888 = scalar_lea.vmem %s11, %s887
        %p889 = pneg %p343
        %p890 = pneg %p340
        %p891 = scmp.lt.s32.totalorder %s41, 1
        %s892 = scalar_select %p891, %s41, 1
        %s893 = scalar_lea.vmem %s12, %s892
        %p894 = pneg %p369
        %p895 = pneg %p366
        %s896 = sand.u32 %s41, 1
        %s897 = scalar_lea.sflag [#allocation13], %s896
        %s898 = sand.u32 %s382, 1
        %s899 = smul.addr %s898, 32
        %s900 = scalar_lea.vmem [#allocation12], %s899
        %p901 = pneg %p395
        %p902 = pneg %p392
        %s903 = sand.u32 %s41, 1
        %s904 = scalar_lea.sflag [#allocation13], %s903
        %s905 = sand.u32 %s408, 1
        %s906 = scalar_lea.vmem [#allocation14], %s905
        %p907 = pneg %p421
        %p908 = pneg %p418
        %p909 = scmp.lt.s32.totalorder %s41, 1
        %s910 = scalar_select %p909, %s41, 1
        %s911 = smul.addr %s910, 8
        %s912 = smul.addr %s911, 8
        %s913 = scalar_lea.vmem %s15, %s912
        %p914 = pneg %p447
        %p915 = pneg %p444
        %p916 = scmp.lt.s32.totalorder %s41, 1
        %s917 = scalar_select %p916, %s41, 1
        %s918 = scalar_lea.vmem %s16, %s917
        %p919 = pneg %p473
        %p920 = pneg %p470
        %p921 = pneg %p494
        %p922 = pneg %p491
        %p923 = pneg %p515
        %p924 = pneg %p512
        %p925 = pneg %p536
        %p926 = pneg %p533
        %p927 = scmp.lt.s32.totalorder %s41, 1
        %s928 = scalar_select %p927, %s41, 1
        %s929 = smul.addr %s928, 4
        %s930 = smul.addr %s929, 8
        %s931 = scalar_lea.vmem %s3, %s930
        %p932 = scmp.lt.s32.totalorder %s41, 1
        %s933 = scalar_select %p932, %s41, 1
        %s934 = scalar_lea.vmem %s4, %s933
        %p935 = scmp.lt.s32.totalorder %s41, 1
        %s936 = scalar_select %p935, %s41, 1
        %s937 = smul.addr %s936, 4
        %s938 = smul.addr %s937, 8
        %s939 = scalar_lea.vmem %s5, %s938
        %p940 = scmp.lt.s32.totalorder %s41, 1
        %s941 = scalar_select %p940, %s41, 1
        %s942 = scalar_lea.vmem %s6, %s941
        %p943 = scmp.lt.s32.totalorder %s41, 1
        %s944 = scalar_select %p943, %s41, 1
        %s945 = smul.addr %s944, 4
        %s946 = smul.addr %s945, 8
        %s947 = scalar_lea.vmem %s7, %s946
        %p948 = scmp.lt.s32.totalorder %s41, 1
        %s949 = scalar_select %p948, %s41, 1
        %s950 = scalar_lea.vmem %s10, %s949
        %p951 = scmp.lt.s32.totalorder %s41, 1
        %s952 = scalar_select %p951, %s41, 1
        %s953 = scalar_lea.vmem %s11, %s952
        %p954 = scmp.lt.s32.totalorder %s41, 1
        %s955 = scalar_select %p954, %s41, 1
        %s956 = scalar_lea.vmem %s12, %s955
        %p957 = scmp.lt.s32.totalorder %s41, 1
        %s958 = scalar_select %p957, %s41, 1
        %s959 = smul.addr %s958, 8
        %s960 = smul.addr %s959, 8
        %s961 = scalar_lea.vmem %s15, %s960
        %p962 = scmp.lt.s32.totalorder %s41, 1
        %s963 = scalar_select %p962, %s41, 1
        %s964 = scalar_lea.vmem %s16, %s963
        %p965 = scmp.eq.s32.totalorder %s41, 0
        // Predicated region
        $region125: #{tpu_custom_call.1} parent=95 // pred_check
          %p966 = pneg %p965
        $region126: #{tpu_custom_call.1} parent=95 // pred_check_branch
          %968 = sbr.rel (%p966) target = $region128
        $region127: #{tpu_custom_call.1} parent=95 // pred_region
          %v969 = vld [vmem:[#allocation3] sm:$0xff]
          %v970 = vld [vmem:[#allocation3 + $0x8] sm:$0xff]
          %vm971 = vcmask 261120
          %972 = vst.msk [vmem:[#allocation2] sm:$0xff] %vm971, %v969
          %973 = vst.msk [vmem:[#allocation2 + $0x8] sm:$0xff] %vm971, %v970
        $region128: #{tpu_custom_call.1} parent=95 // pred_fallthru
          _
        %v974 = vld [vmem:[#allocation2] sm:$0xff]
        %v975 = vld [vmem:[#allocation2 + $0x8] sm:$0xff]
        %v976 = vld [vmem:[%s770] sm:$0x1]
        %v977 = vld [vmem:[%s779] sm:$0x1]
        %vm978 = vcmask 261120
        %v979 = vsel %vm978, %v974, 0.0
        %980 = vadd.xlane.f32.xlu0 %v979
        %v981 = vpop.xlane.xlu0 %980
        %v982 = vsel %vm978, %v975, 0.0
        %983 = vadd.xlane.f32.xlu0 %v982
        %v984 = vpop.xlane.xlu0 %983
        %v985 = vrcp.pop 32.0
        %v986 = vmul.f32 32.0, %v985
        %v987 = vsub.f32 1.0, %v986
        %v988 = vmul.f32 %v985, %v987
        %v989 = vadd.f32 %v985, %v988
        %vm990 = vweird.f32 %v985
        %v991 = vsel %vm990, %v985, %v989
        %v992 = vmul.f32 %v981, %v991
        %v993 = vmul.f32 %v984, %v991
        %v994 = vsub.f32 %v974, %v992
        %v995 = vsub.f32 %v975, %v993
        %v996 = vmul.f32 %v994, %v994
        %v997 = vmul.f32 %v995, %v995
        %v998 = vsel %vm978, %v996, 0.0
        %999 = vadd.xlane.f32.xlu0 %v998
        %v1000 = vpop.xlane.xlu0 %999
        %v1001 = vsel %vm978, %v997, 0.0
        %1002 = vadd.xlane.f32.xlu0 %v1001
        %v1003 = vpop.xlane.xlu0 %1002
        %v1004 = vmul.f32 %v1000, %v991
        %v1005 = vmul.f32 %v1003, %v991
        %v1006 = vadd.f32 %v1004, 1e-05
        %v1007 = vadd.f32 %v1005, 1e-05
        %v1008 = vrsqrt.pop %v1006
        %v1009 = vmul.f32 %v1008, %v1006
        %v1010 = vmul.f32 %v1009, %v1008
        %v1011 = vmul.f32 0.5, %v1010
        %v1012 = vsub.f32 1.5, %v1011
        %v1013 = vmul.f32 %v1008, %v1012
        %vm1014 = vweird.f32 %v1006
        %vm1015 = vweird.f32 %v1008
        %vm1016 = vmor %vm1014, %vm1015
        %v1017 = vsel %vm1016, %v1008, %v1013
        %v1018 = vrsqrt.pop %v1007
        %v1019 = vmul.f32 %v1018, %v1007
        %v1020 = vmul.f32 %v1019, %v1018
        %v1021 = vmul.f32 0.5, %v1020
        %v1022 = vsub.f32 1.5, %v1021
        %v1023 = vmul.f32 %v1018, %v1022
        %vm1024 = vweird.f32 %v1007
        %vm1025 = vweird.f32 %v1018
        %vm1026 = vmor %vm1024, %vm1025
        %v1027 = vsel %vm1026, %v1018, %v1023
        %v1028 = vmul.f32 %v994, %v1017
        %v1029 = vmul.f32 %v995, %v1027
        %v1031 = vperm.slane %v976, 0
        %v1033 = vmul.f32 %v1028, %v1031
        %v1034 = vmul.f32 %v1029, %v1031
        %v1036 = vperm.slane %v977, 0
        %v1038 = vadd.f32 %v1033, %v1036
        %v1039 = vadd.f32 %v1034, %v1036
        %v1040 = vld [vmem:[%s931] sm:$0xff]
        %v1041 = vld [vmem:[%s931 + $0x8] sm:$0xff]
        %v1042 = vld [vmem:[%s931 + $0x10] sm:$0xff]
        %v1043 = vld [vmem:[%s931 + $0x18] sm:$0xff]
        %v1044 = vld [vmem:[%s934] sm:$0x1]
        %v1046 = vperm.slane %v1044, 0
        %v1049 = vsel %vm978, %v1038, 0
        %v1052 = vsel %vm978, %v1039, 0
        %1054 = vmatpush.msra.mxu0 0.0
        %1055 = vmatpush.msra.mxu0 0.0
        %1056 = vmatpush.msra.mxu0 0.0
        %1057 = vmatpush.msra.mxu0 0.0
        %1058 = vmatpush.msra.mxu0 0.0
        %1059 = vmatpush.msra.mxu0 0.0
        %1060 = vmatpush.msra.mxu0 0.0
        %1061 = vmatpush.msra.mxu0 0.0
        %1062 = vmatpush.msra.mxu0 0.0
        %1063 = vmatpush.msra.mxu0 0.0
        %1064 = vmatpush.msra.mxu0 0.0
        %1065 = vmatpush.msra.mxu0 0.0
        %1066 = vmatpush.msra.mxu0 %v1043
        %1067 = vmatpush.msra.mxu0 %v1042
        %1068 = vmatpush.msra.mxu0 %v1041
        %1069 = vmatpush.msra.mxu0 %v1040
        %1070 = vmatmul.f32.gmra.mxu0 %v1049
        %v1071 = vpop.f32.mrf.mxu0
        %v1072 = vadd.f32 %v1046, %v1071
        %1073 = vmatmul.f32.gmra.mxu0 %v1052
        %v1074 = vpop.f32.mrf.mxu0
        %v1075 = vadd.f32 %v1046, %v1074
        %1076 = vdwg.mxu0
        %v1077 = vld [vmem:[%s939] sm:$0xff]
        %v1078 = vld [vmem:[%s939 + $0x8] sm:$0xff]
        %v1079 = vld [vmem:[%s939 + $0x10] sm:$0xff]
        %v1080 = vld [vmem:[%s939 + $0x18] sm:$0xff]
        %v1081 = vld [vmem:[%s942] sm:$0x1]
        %v1083 = vperm.slane %v1081, 0
        %1085 = vmatpush.msra.mxu0 0.0
        %1086 = vmatpush.msra.mxu0 0.0
        %1087 = vmatpush.msra.mxu0 0.0
        %1088 = vmatpush.msra.mxu0 0.0
        %1089 = vmatpush.msra.mxu0 0.0
        %1090 = vmatpush.msra.mxu0 0.0
        %1091 = vmatpush.msra.mxu0 0.0
        %1092 = vmatpush.msra.mxu0 0.0
        %1093 = vmatpush.msra.mxu0 0.0
        %1094 = vmatpush.msra.mxu0 0.0
        %1095 = vmatpush.msra.mxu0 0.0
        %1096 = vmatpush.msra.mxu0 0.0
        %1097 = vmatpush.msra.mxu0 %v1080
        %1098 = vmatpush.msra.mxu0 %v1079
        %1099 = vmatpush.msra.mxu0 %v1078
        %1100 = vmatpush.msra.mxu0 %v1077
        %1101 = vmatmul.f32.gmra.mxu0 %v1049
        %v1102 = vpop.f32.mrf.mxu0
        %v1103 = vadd.f32 %v1083, %v1102
        %1104 = vmatmul.f32.gmra.mxu0 %v1052
        %v1105 = vpop.f32.mrf.mxu0
        %v1106 = vadd.f32 %v1083, %v1105
        %1107 = vdwg.mxu0
        %v1108 = vld [vmem:[%s947] sm:$0xff]
        %v1109 = vld [vmem:[%s947 + $0x8] sm:$0xff]
        %v1110 = vld [vmem:[%s947 + $0x10] sm:$0xff]
        %v1111 = vld [vmem:[%s947 + $0x18] sm:$0xff]
        %v1112 = vld [vmem:[%s788] sm:$0x1]
        %v1114 = vperm.slane %v1112, 0
        %1116 = vmatpush.msra.mxu0 0.0
        %1117 = vmatpush.msra.mxu0 0.0
        %1118 = vmatpush.msra.mxu0 0.0
        %1119 = vmatpush.msra.mxu0 0.0
        %1120 = vmatpush.msra.mxu0 0.0
        %1121 = vmatpush.msra.mxu0 0.0
        %1122 = vmatpush.msra.mxu0 0.0
        %1123 = vmatpush.msra.mxu0 0.0
        %1124 = vmatpush.msra.mxu0 0.0
        %1125 = vmatpush.msra.mxu0 0.0
        %1126 = vmatpush.msra.mxu0 0.0
        %1127 = vmatpush.msra.mxu0 0.0
        %1128 = vmatpush.msra.mxu0 %v1111
        %1129 = vmatpush.msra.mxu0 %v1110
        %1130 = vmatpush.msra.mxu0 %v1109
        %1131 = vmatpush.msra.mxu0 %v1108
        %1132 = vmatmul.f32.gmra.mxu0 %v1049
        %v1133 = vpop.f32.mrf.mxu0
        %v1134 = vadd.f32 %v1114, %v1133
        %1135 = vmatmul.f32.gmra.mxu0 %v1052
        %v1136 = vpop.f32.mrf.mxu0
        %v1137 = vadd.f32 %v1114, %v1136
        %1138 = vdwg.mxu0
        %v1139 = vld [vmem:[%s798] sm:$0xff]
        %v1140 = vld [vmem:[%s798 + $0x8] sm:$0xff]
        %v1141 = vld [vmem:[%s798 + $0x10] sm:$0xff]
        %v1142 = vld [vmem:[%s798 + $0x18] sm:$0xff]
        %vm1143 = vcmask 64512
        %v1145 = vsel %vm1143, %v1072, 0
        %v1148 = vsel %vm1143, %v1103, 0
        %1150 = vmatpush.xpose.msra.mxu0 0.0
        %1151 = vmatpush.xpose.msra.mxu0 0.0
        %1152 = vmatpush.xpose.msra.mxu0 0.0
        %1153 = vmatpush.xpose.msra.mxu0 0.0
        %1154 = vmatpush.xpose.msra.mxu0 0.0
        %1155 = vmatpush.xpose.msra.mxu0 0.0
        %1156 = vmatpush.xpose.msra.mxu0 0.0
        %1157 = vmatpush.xpose.msra.mxu0 0.0
        %1158 = vmatpush.xpose.msra.mxu0 0.0
        %1159 = vmatpush.xpose.msra.mxu0 0.0
        %1160 = vmatpush.xpose.msra.mxu0 0.0
        %1161 = vmatpush.xpose.msra.mxu0 0.0
        %1162 = vmatpush.xpose.msra.mxu0 0.0
        %1163 = vmatpush.xpose.msra.mxu0 0.0
        %1164 = vmatpush.xpose.msra.mxu0 0.0
        %1165 = vmatpush.xpose.msra.mxu0 %v1148
        %1166 = vmatmul.f32.gmra.mxu0 %v1145
        %v1167 = vpop.f32.mrf.mxu0
        %v1168 = vadd.f32 0.0, %v1167
        %1169 = vdwg.mxu0
        %v1171 = vsel %vm1143, %v1075, 0
        %v1174 = vsel %vm1143, %v1106, 0
        %1176 = vmatpush.xpose.msra.mxu0 0.0
        %1177 = vmatpush.xpose.msra.mxu0 0.0
        %1178 = vmatpush.xpose.msra.mxu0 0.0
        %1179 = vmatpush.xpose.msra.mxu0 0.0
        %1180 = vmatpush.xpose.msra.mxu0 0.0
        %1181 = vmatpush.xpose.msra.mxu0 0.0
        %1182 = vmatpush.xpose.msra.mxu0 0.0
        %1183 = vmatpush.xpose.msra.mxu0 0.0
        %1184 = vmatpush.xpose.msra.mxu0 0.0
        %1185 = vmatpush.xpose.msra.mxu0 0.0
        %1186 = vmatpush.xpose.msra.mxu0 0.0
        %1187 = vmatpush.xpose.msra.mxu0 0.0
        %1188 = vmatpush.xpose.msra.mxu0 0.0
        %1189 = vmatpush.xpose.msra.mxu0 0.0
        %1190 = vmatpush.xpose.msra.mxu0 0.0
        %1191 = vmatpush.xpose.msra.mxu0 %v1174
        %1192 = vmatmul.f32.gmra.mxu0 %v1171
        %v1193 = vpop.f32.mrf.mxu0
        %v1194 = vadd.f32 0.0, %v1193
        %1195 = vdwg.mxu0
        %v1196 = vmul.f32 %v1168, 0.35355338
        %v1197 = vmul.f32 %v1194, 0.35355338
        %v1198 = vsel %vm1143, %v1196, -inf
        %1199 = vmax.xlane.f32.xlu0 %v1198
        %v1200 = vpop.xlane.xlu0 %1199
        %v1201 = vsel %vm1143, %v1197, -inf
        %1202 = vmax.xlane.f32.xlu0 %v1201
        %v1203 = vpop.xlane.xlu0 %1202
        %v1204 = vsub.f32 %v1196, %v1200
        %v1205 = vsub.f32 %v1197, %v1203
        %v1206 = vmul.f32 %v1204, 1.442695
        %v1207 = vpow.pop %v1206
        %v1208 = vmul.f32 %v1205, 1.442695
        %v1209 = vpow.pop %v1208
        %v1210 = vsel %vm1143, %v1207, 0.0
        %1211 = vadd.xlane.f32.xlu0 %v1210
        %v1212 = vpop.xlane.xlu0 %1211
        %v1213 = vsel %vm1143, %v1209, 0.0
        %1214 = vadd.xlane.f32.xlu0 %v1213
        %v1215 = vpop.xlane.xlu0 %1214
        %v1217 = vsel %vm1143, %v1207, 0
        %1219 = vmatpush.msra.mxu0 0.0
        %1220 = vmatpush.msra.mxu0 0.0
        %1221 = vmatpush.msra.mxu0 0.0
        %1222 = vmatpush.msra.mxu0 0.0
        %1223 = vmatpush.msra.mxu0 0.0
        %1224 = vmatpush.msra.mxu0 0.0
        %1225 = vmatpush.msra.mxu0 0.0
        %1226 = vmatpush.msra.mxu0 0.0
        %1227 = vmatpush.msra.mxu0 0.0
        %1228 = vmatpush.msra.mxu0 0.0
        %1229 = vmatpush.msra.mxu0 0.0
        %1230 = vmatpush.msra.mxu0 0.0
        %1231 = vmatpush.msra.mxu0 0.0
        %1232 = vmatpush.msra.mxu0 0.0
        %1233 = vmatpush.msra.mxu0 0.0
        %1234 = vmatpush.msra.mxu0 %v1134
        %1235 = vmatmul.f32.gmra.mxu0 %v1217
        %v1236 = vpop.f32.mrf.mxu0
        %v1237 = vadd.f32 0.0, %v1236
        %1238 = vdwg.mxu0
        %v1240 = vsel %vm1143, %v1209, 0
        %1242 = vmatpush.msra.mxu0 0.0
        %1243 = vmatpush.msra.mxu0 0.0
        %1244 = vmatpush.msra.mxu0 0.0
        %1245 = vmatpush.msra.mxu0 0.0
        %1246 = vmatpush.msra.mxu0 0.0
        %1247 = vmatpush.msra.mxu0 0.0
        %1248 = vmatpush.msra.mxu0 0.0
        %1249 = vmatpush.msra.mxu0 0.0
        %1250 = vmatpush.msra.mxu0 0.0
        %1251 = vmatpush.msra.mxu0 0.0
        %1252 = vmatpush.msra.mxu0 0.0
        %1253 = vmatpush.msra.mxu0 0.0
        %1254 = vmatpush.msra.mxu0 0.0
        %1255 = vmatpush.msra.mxu0 0.0
        %1256 = vmatpush.msra.mxu0 0.0
        %1257 = vmatpush.msra.mxu0 %v1137
        %1258 = vmatmul.f32.gmra.mxu0 %v1240
        %v1259 = vpop.f32.mrf.mxu0
        %v1260 = vadd.f32 0.0, %v1259
        %1261 = vdwg.mxu0
        %v1262 = vrcp.pop %v1212
        %v1263 = vrcp.pop %v1215
        %v1264 = vmul.f32 %v1237, %v1262
        %v1265 = vmul.f32 %v1260, %v1263
        %1266 = vrot.lane.b32.xlu0 %v1072, 120
        %v1267 = vpop.permute.xlu0 %1266
        %1268 = vrot.lane.b32.xlu0 %v1103, 120
        %v1269 = vpop.permute.xlu0 %1268
        %v1270 = vsel %vm1143, %v1267, 0
        %v1272 = vsel %vm1143, %v1269, 0
        %1274 = vmatpush.xpose.msra.mxu0 0.0
        %1275 = vmatpush.xpose.msra.mxu0 0.0
        %1276 = vmatpush.xpose.msra.mxu0 0.0
        %1277 = vmatpush.xpose.msra.mxu0 0.0
        %1278 = vmatpush.xpose.msra.mxu0 0.0
        %1279 = vmatpush.xpose.msra.mxu0 0.0
        %1280 = vmatpush.xpose.msra.mxu0 0.0
        %1281 = vmatpush.xpose.msra.mxu0 0.0
        %1282 = vmatpush.xpose.msra.mxu0 0.0
        %1283 = vmatpush.xpose.msra.mxu0 0.0
        %1284 = vmatpush.xpose.msra.mxu0 0.0
        %1285 = vmatpush.xpose.msra.mxu0 0.0
        %1286 = vmatpush.xpose.msra.mxu0 0.0
        %1287 = vmatpush.xpose.msra.mxu0 0.0
        %1288 = vmatpush.xpose.msra.mxu0 0.0
        %1289 = vmatpush.xpose.msra.mxu0 %v1272
        %1290 = vmatmul.f32.gmra.mxu0 %v1270
        %v1291 = vpop.f32.mrf.mxu0
        %v1292 = vadd.f32 0.0, %v1291
        %1293 = vdwg.mxu0
        %1294 = vrot.lane.b32.xlu0 %v1075, 120
        %v1295 = vpop.permute.xlu0 %1294
        %1296 = vrot.lane.b32.xlu0 %v1106, 120
        %v1297 = vpop.permute.xlu0 %1296
        %v1298 = vsel %vm1143, %v1295, 0
        %v1300 = vsel %vm1143, %v1297, 0
        %1302 = vmatpush.xpose.msra.mxu0 0.0
        %1303 = vmatpush.xpose.msra.mxu0 0.0
        %1304 = vmatpush.xpose.msra.mxu0 0.0
        %1305 = vmatpush.xpose.msra.mxu0 0.0
        %1306 = vmatpush.xpose.msra.mxu0 0.0
        %1307 = vmatpush.xpose.msra.mxu0 0.0
        %1308 = vmatpush.xpose.msra.mxu0 0.0
        %1309 = vmatpush.xpose.msra.mxu0 0.0
        %1310 = vmatpush.xpose.msra.mxu0 0.0
        %1311 = vmatpush.xpose.msra.mxu0 0.0
        %1312 = vmatpush.xpose.msra.mxu0 0.0
        %1313 = vmatpush.xpose.msra.mxu0 0.0
        %1314 = vmatpush.xpose.msra.mxu0 0.0
        %1315 = vmatpush.xpose.msra.mxu0 0.0
        %1316 = vmatpush.xpose.msra.mxu0 0.0
        %1317 = vmatpush.xpose.msra.mxu0 %v1300
        %1318 = vmatmul.f32.gmra.mxu0 %v1298
        %v1319 = vpop.f32.mrf.mxu0
        %v1320 = vadd.f32 0.0, %v1319
        %1321 = vdwg.mxu0
        %v1322 = vmul.f32 %v1292, 0.35355338
        %v1323 = vmul.f32 %v1320, 0.35355338
        %v1324 = vsel %vm1143, %v1322, -inf
        %1325 = vmax.xlane.f32.xlu0 %v1324
        %v1326 = vpop.xlane.xlu0 %1325
        %v1327 = vsel %vm1143, %v1323, -inf
        %1328 = vmax.xlane.f32.xlu0 %v1327
        %v1329 = vpop.xlane.xlu0 %1328
        %v1330 = vsub.f32 %v1322, %v1326
        %v1331 = vsub.f32 %v1323, %v1329
        %v1332 = vmul.f32 %v1330, 1.442695
        %v1333 = vpow.pop %v1332
        %v1334 = vmul.f32 %v1331, 1.442695
        %v1335 = vpow.pop %v1334
        %v1336 = vsel %vm1143, %v1333, 0.0
        %1337 = vadd.xlane.f32.xlu0 %v1336
        %v1338 = vpop.xlane.xlu0 %1337
        %v1339 = vsel %vm1143, %v1335, 0.0
        %1340 = vadd.xlane.f32.xlu0 %v1339
        %v1341 = vpop.xlane.xlu0 %1340
        %1343 = vrot.lane.b32.xlu0 %v1134, 120
        %v1344 = vpop.permute.xlu0 %1343
        %v1347 = vsel %vm1143, %v1333, 0
        %1349 = vmatpush.msra.mxu0 0.0
        %1350 = vmatpush.msra.mxu0 0.0
        %1351 = vmatpush.msra.mxu0 0.0
        %1352 = vmatpush.msra.mxu0 0.0
        %1353 = vmatpush.msra.mxu0 0.0
        %1354 = vmatpush.msra.mxu0 0.0
        %1355 = vmatpush.msra.mxu0 0.0
        %1356 = vmatpush.msra.mxu0 0.0
        %1357 = vmatpush.msra.mxu0 0.0
        %1358 = vmatpush.msra.mxu0 0.0
        %1359 = vmatpush.msra.mxu0 0.0
        %1360 = vmatpush.msra.mxu0 0.0
        %1361 = vmatpush.msra.mxu0 0.0
        %1362 = vmatpush.msra.mxu0 0.0
        %1363 = vmatpush.msra.mxu0 0.0
        %1364 = vmatpush.msra.mxu0 %v1344
        %1365 = vmatmul.f32.gmra.mxu0 %v1347
        %v1366 = vpop.f32.mrf.mxu0
        %v1367 = vadd.f32 0.0, %v1366
        %1368 = vdwg.mxu0
        %1370 = vrot.lane.b32.xlu0 %v1137, 120
        %v1371 = vpop.permute.xlu0 %1370
        %v1374 = vsel %vm1143, %v1335, 0
        %1376 = vmatpush.msra.mxu0 0.0
        %1377 = vmatpush.msra.mxu0 0.0
        %1378 = vmatpush.msra.mxu0 0.0
        %1379 = vmatpush.msra.mxu0 0.0
        %1380 = vmatpush.msra.mxu0 0.0
        %1381 = vmatpush.msra.mxu0 0.0
        %1382 = vmatpush.msra.mxu0 0.0
        %1383 = vmatpush.msra.mxu0 0.0
        %1384 = vmatpush.msra.mxu0 0.0
        %1385 = vmatpush.msra.mxu0 0.0
        %1386 = vmatpush.msra.mxu0 0.0
        %1387 = vmatpush.msra.mxu0 0.0
        %1388 = vmatpush.msra.mxu0 0.0
        %1389 = vmatpush.msra.mxu0 0.0
        %1390 = vmatpush.msra.mxu0 0.0
        %1391 = vmatpush.msra.mxu0 %v1371
        %1392 = vmatmul.f32.gmra.mxu0 %v1374
        %v1393 = vpop.f32.mrf.mxu0
        %v1394 = vadd.f32 0.0, %v1393
        %1395 = vdwg.mxu0
        %v1396 = vrcp.pop %v1338
        %v1397 = vrcp.pop %v1341
        %v1398 = vmul.f32 %v1367, %v1396
        %v1399 = vmul.f32 %v1394, %v1397
        %v1401 = vsel %vm1143, %v1398, 0
        %v1404 = vsel %vm1143, %v1399, 0
        %1406 = vmatpush.msra.mxu0 0.0
        %1407 = vmatpush.msra.mxu0 0.0
        %1408 = vmatpush.msra.mxu0 0.0
        %1409 = vmatpush.msra.mxu0 0.0
        %1410 = vmatpush.msra.mxu0 0.0
        %1411 = vmatpush.msra.mxu0 0.0
        %1412 = vmatpush.msra.mxu0 0.0
        %1413 = vmatpush.msra.mxu0 0.0
        %1414 = vmatpush.msra.mxu0 0.0
        %1415 = vmatpush.msra.mxu0 0.0
        %1416 = vmatpush.msra.mxu0 0.0
        %1417 = vmatpush.msra.mxu0 0.0
        %1418 = vmatpush.msra.mxu0 0.0
        %1419 = vmatpush.msra.mxu0 0.0
        %1420 = vmatpush.msra.mxu0 0.0
        %1421 = vmatpush.msra.mxu0 %v1140
        %1422 = vmatmul.f32.gmra.mxu0 %v1401
        %v1423 = vpop.f32.mrf.mxu0
        %v1424 = vadd.f32 0.0, %v1423
        %1425 = vmatmul.f32.gmra.mxu0 %v1404
        %v1426 = vpop.f32.mrf.mxu0
        %v1427 = vadd.f32 0.0, %v1426
        %1428 = vdwg.mxu0
        %v1430 = vsel %vm1143, %v1264, 0
        %v1433 = vsel %vm1143, %v1265, 0
        %1435 = vmatpush.msra.mxu0 0.0
        %1436 = vmatpush.msra.mxu0 0.0
        %1437 = vmatpush.msra.mxu0 0.0
        %1438 = vmatpush.msra.mxu0 0.0
        %1439 = vmatpush.msra.mxu0 0.0
        %1440 = vmatpush.msra.mxu0 0.0
        %1441 = vmatpush.msra.mxu0 0.0
        %1442 = vmatpush.msra.mxu0 0.0
        %1443 = vmatpush.msra.mxu0 0.0
        %1444 = vmatpush.msra.mxu0 0.0
        %1445 = vmatpush.msra.mxu0 0.0
        %1446 = vmatpush.msra.mxu0 0.0
        %1447 = vmatpush.msra.mxu0 0.0
        %1448 = vmatpush.msra.mxu0 0.0
        %1449 = vmatpush.msra.mxu0 0.0
        %1450 = vmatpush.msra.mxu0 %v1139
        %1451 = vmatmul.f32.gmra.mxu0 %v1430
        %v1452 = vpop.f32.mrf.mxu0
        %v1453 = vadd.f32 %v1424, %v1452
        %1454 = vmatmul.f32.gmra.mxu0 %v1433
        %v1455 = vpop.f32.mrf.mxu0
        %v1456 = vadd.f32 %v1427, %v1455
        %1457 = vdwg.mxu0
        %1458 = vrot.lane.b32.xlu0 %v1072, 112
        %v1459 = vpop.permute.xlu0 %1458
        %1460 = vrot.lane.b32.xlu0 %v1103, 112
        %v1461 = vpop.permute.xlu0 %1460
        %v1462 = vsel %vm1143, %v1459, 0
        %v1464 = vsel %vm1143, %v1461, 0
        %1466 = vmatpush.xpose.msra.mxu0 0.0
        %1467 = vmatpush.xpose.msra.mxu0 0.0
        %1468 = vmatpush.xpose.msra.mxu0 0.0
        %1469 = vmatpush.xpose.msra.mxu0 0.0
        %1470 = vmatpush.xpose.msra.mxu0 0.0
        %1471 = vmatpush.xpose.msra.mxu0 0.0
        %1472 = vmatpush.xpose.msra.mxu0 0.0
        %1473 = vmatpush.xpose.msra.mxu0 0.0
        %1474 = vmatpush.xpose.msra.mxu0 0.0
        %1475 = vmatpush.xpose.msra.mxu0 0.0
        %1476 = vmatpush.xpose.msra.mxu0 0.0
        %1477 = vmatpush.xpose.msra.mxu0 0.0
        %1478 = vmatpush.xpose.msra.mxu0 0.0
        %1479 = vmatpush.xpose.msra.mxu0 0.0
        %1480 = vmatpush.xpose.msra.mxu0 0.0
        %1481 = vmatpush.xpose.msra.mxu0 %v1464
        %1482 = vmatmul.f32.gmra.mxu0 %v1462
        %v1483 = vpop.f32.mrf.mxu0
        %v1484 = vadd.f32 0.0, %v1483
        %1485 = vdwg.mxu0
        %1486 = vrot.lane.b32.xlu0 %v1075, 112
        %v1487 = vpop.permute.xlu0 %1486
        %1488 = vrot.lane.b32.xlu0 %v1106, 112
        %v1489 = vpop.permute.xlu0 %1488
        %v1490 = vsel %vm1143, %v1487, 0
        %v1492 = vsel %vm1143, %v1489, 0
        %1494 = vmatpush.xpose.msra.mxu0 0.0
        %1495 = vmatpush.xpose.msra.mxu0 0.0
        %1496 = vmatpush.xpose.msra.mxu0 0.0
        %1497 = vmatpush.xpose.msra.mxu0 0.0
        %1498 = vmatpush.xpose.msra.mxu0 0.0
        %1499 = vmatpush.xpose.msra.mxu0 0.0
        %1500 = vmatpush.xpose.msra.mxu0 0.0
        %1501 = vmatpush.xpose.msra.mxu0 0.0
        %1502 = vmatpush.xpose.msra.mxu0 0.0
        %1503 = vmatpush.xpose.msra.mxu0 0.0
        %1504 = vmatpush.xpose.msra.mxu0 0.0
        %1505 = vmatpush.xpose.msra.mxu0 0.0
        %1506 = vmatpush.xpose.msra.mxu0 0.0
        %1507 = vmatpush.xpose.msra.mxu0 0.0
        %1508 = vmatpush.xpose.msra.mxu0 0.0
        %1509 = vmatpush.xpose.msra.mxu0 %v1492
        %1510 = vmatmul.f32.gmra.mxu0 %v1490
        %v1511 = vpop.f32.mrf.mxu0
        %v1512 = vadd.f32 0.0, %v1511
        %1513 = vdwg.mxu0
        %v1514 = vmul.f32 %v1484, 0.35355338
        %v1515 = vmul.f32 %v1512, 0.35355338
        %v1516 = vsel %vm1143, %v1514, -inf
        %1517 = vmax.xlane.f32.xlu0 %v1516
        %v1518 = vpop.xlane.xlu0 %1517
        %v1519 = vsel %vm1143, %v1515, -inf
        %1520 = vmax.xlane.f32.xlu0 %v1519
        %v1521 = vpop.xlane.xlu0 %1520
        %v1522 = vsub.f32 %v1514, %v1518
        %v1523 = vsub.f32 %v1515, %v1521
        %v1524 = vmul.f32 %v1522, 1.442695
        %v1525 = vpow.pop %v1524
        %v1526 = vmul.f32 %v1523, 1.442695
        %v1527 = vpow.pop %v1526
        %v1528 = vsel %vm1143, %v1525, 0.0
        %1529 = vadd.xlane.f32.xlu0 %v1528
        %v1530 = vpop.xlane.xlu0 %1529
        %v1531 = vsel %vm1143, %v1527, 0.0
        %1532 = vadd.xlane.f32.xlu0 %v1531
        %v1533 = vpop.xlane.xlu0 %1532
        %1534 = vrot.lane.b32.xlu0 %v1134, 112
        %v1535 = vpop.permute.xlu0 %1534
        %v1538 = vsel %vm1143, %v1525, 0
        %1540 = vmatpush.msra.mxu0 0.0
        %1541 = vmatpush.msra.mxu0 0.0
        %1542 = vmatpush.msra.mxu0 0.0
        %1543 = vmatpush.msra.mxu0 0.0
        %1544 = vmatpush.msra.mxu0 0.0
        %1545 = vmatpush.msra.mxu0 0.0
        %1546 = vmatpush.msra.mxu0 0.0
        %1547 = vmatpush.msra.mxu0 0.0
        %1548 = vmatpush.msra.mxu0 0.0
        %1549 = vmatpush.msra.mxu0 0.0
        %1550 = vmatpush.msra.mxu0 0.0
        %1551 = vmatpush.msra.mxu0 0.0
        %1552 = vmatpush.msra.mxu0 0.0
        %1553 = vmatpush.msra.mxu0 0.0
        %1554 = vmatpush.msra.mxu0 0.0
        %1555 = vmatpush.msra.mxu0 %v1535
        %1556 = vmatmul.f32.gmra.mxu0 %v1538
        %v1557 = vpop.f32.mrf.mxu0
        %v1558 = vadd.f32 0.0, %v1557
        %1559 = vdwg.mxu0
        %1560 = vrot.lane.b32.xlu0 %v1137, 112
        %v1561 = vpop.permute.xlu0 %1560
        %v1564 = vsel %vm1143, %v1527, 0
        %1566 = vmatpush.msra.mxu0 0.0
        %1567 = vmatpush.msra.mxu0 0.0
        %1568 = vmatpush.msra.mxu0 0.0
        %1569 = vmatpush.msra.mxu0 0.0
        %1570 = vmatpush.msra.mxu0 0.0
        %1571 = vmatpush.msra.mxu0 0.0
        %1572 = vmatpush.msra.mxu0 0.0
        %1573 = vmatpush.msra.mxu0 0.0
        %1574 = vmatpush.msra.mxu0 0.0
        %1575 = vmatpush.msra.mxu0 0.0
        %1576 = vmatpush.msra.mxu0 0.0
        %1577 = vmatpush.msra.mxu0 0.0
        %1578 = vmatpush.msra.mxu0 0.0
        %1579 = vmatpush.msra.mxu0 0.0
        %1580 = vmatpush.msra.mxu0 0.0
        %1581 = vmatpush.msra.mxu0 %v1561
        %1582 = vmatmul.f32.gmra.mxu0 %v1564
        %v1583 = vpop.f32.mrf.mxu0
        %v1584 = vadd.f32 0.0, %v1583
        %1585 = vdwg.mxu0
        %v1586 = vrcp.pop %v1530
        %v1587 = vrcp.pop %v1533
        %v1588 = vmul.f32 %v1558, %v1586
        %v1589 = vmul.f32 %v1584, %v1587
        %v1591 = vsel %vm1143, %v1588, 0
        %v1594 = vsel %vm1143, %v1589, 0
        %1596 = vmatpush.msra.mxu0 0.0
        %1597 = vmatpush.msra.mxu0 0.0
        %1598 = vmatpush.msra.mxu0 0.0
        %1599 = vmatpush.msra.mxu0 0.0
        %1600 = vmatpush.msra.mxu0 0.0
        %1601 = vmatpush.msra.mxu0 0.0
        %1602 = vmatpush.msra.mxu0 0.0
        %1603 = vmatpush.msra.mxu0 0.0
        %1604 = vmatpush.msra.mxu0 0.0
        %1605 = vmatpush.msra.mxu0 0.0
        %1606 = vmatpush.msra.mxu0 0.0
        %1607 = vmatpush.msra.mxu0 0.0
        %1608 = vmatpush.msra.mxu0 0.0
        %1609 = vmatpush.msra.mxu0 0.0
        %1610 = vmatpush.msra.mxu0 0.0
        %1611 = vmatpush.msra.mxu0 %v1141
        %1612 = vmatmul.f32.gmra.mxu0 %v1591
        %v1613 = vpop.f32.mrf.mxu0
        %v1614 = vadd.f32 0.0, %v1613
        %1615 = vmatmul.f32.gmra.mxu0 %v1594
        %v1616 = vpop.f32.mrf.mxu0
        %v1617 = vadd.f32 0.0, %v1616
        %1618 = vdwg.mxu0
        %v1619 = vadd.f32 %v1453, %v1614
        %v1620 = vadd.f32 %v1456, %v1617
        %1621 = vrot.lane.b32.xlu0 %v1072, 104
        %v1622 = vpop.permute.xlu0 %1621
        %1623 = vrot.lane.b32.xlu0 %v1103, 104
        %v1624 = vpop.permute.xlu0 %1623
        %v1625 = vsel %vm1143, %v1622, 0
        %v1627 = vsel %vm1143, %v1624, 0
        %1629 = vmatpush.xpose.msra.mxu0 0.0
        %1630 = vmatpush.xpose.msra.mxu0 0.0
        %1631 = vmatpush.xpose.msra.mxu0 0.0
        %1632 = vmatpush.xpose.msra.mxu0 0.0
        %1633 = vmatpush.xpose.msra.mxu0 0.0
        %1634 = vmatpush.xpose.msra.mxu0 0.0
        %1635 = vmatpush.xpose.msra.mxu0 0.0
        %1636 = vmatpush.xpose.msra.mxu0 0.0
        %1637 = vmatpush.xpose.msra.mxu0 0.0
        %1638 = vmatpush.xpose.msra.mxu0 0.0
        %1639 = vmatpush.xpose.msra.mxu0 0.0
        %1640 = vmatpush.xpose.msra.mxu0 0.0
        %1641 = vmatpush.xpose.msra.mxu0 0.0
        %1642 = vmatpush.xpose.msra.mxu0 0.0
        %1643 = vmatpush.xpose.msra.mxu0 0.0
        %1644 = vmatpush.xpose.msra.mxu0 %v1627
        %1645 = vmatmul.f32.gmra.mxu0 %v1625
        %v1646 = vpop.f32.mrf.mxu0
        %v1647 = vadd.f32 0.0, %v1646
        %1648 = vdwg.mxu0
        %1649 = vrot.lane.b32.xlu0 %v1075, 104
        %v1650 = vpop.permute.xlu0 %1649
        %1651 = vrot.lane.b32.xlu0 %v1106, 104
        %v1652 = vpop.permute.xlu0 %1651
        %v1653 = vsel %vm1143, %v1650, 0
        %v1655 = vsel %vm1143, %v1652, 0
        %1657 = vmatpush.xpose.msra.mxu0 0.0
        %1658 = vmatpush.xpose.msra.mxu0 0.0
        %1659 = vmatpush.xpose.msra.mxu0 0.0
        %1660 = vmatpush.xpose.msra.mxu0 0.0
        %1661 = vmatpush.xpose.msra.mxu0 0.0
        %1662 = vmatpush.xpose.msra.mxu0 0.0
        %1663 = vmatpush.xpose.msra.mxu0 0.0
        %1664 = vmatpush.xpose.msra.mxu0 0.0
        %1665 = vmatpush.xpose.msra.mxu0 0.0
        %1666 = vmatpush.xpose.msra.mxu0 0.0
        %1667 = vmatpush.xpose.msra.mxu0 0.0
        %1668 = vmatpush.xpose.msra.mxu0 0.0
        %1669 = vmatpush.xpose.msra.mxu0 0.0
        %1670 = vmatpush.xpose.msra.mxu0 0.0
        %1671 = vmatpush.xpose.msra.mxu0 0.0
        %1672 = vmatpush.xpose.msra.mxu0 %v1655
        %1673 = vmatmul.f32.gmra.mxu0 %v1653
        %v1674 = vpop.f32.mrf.mxu0
        %v1675 = vadd.f32 0.0, %v1674
        %1676 = vdwg.mxu0
        %v1677 = vmul.f32 %v1647, 0.35355338
        %v1678 = vmul.f32 %v1675, 0.35355338
        %v1679 = vsel %vm1143, %v1677, -inf
        %1680 = vmax.xlane.f32.xlu0 %v1679
        %v1681 = vpop.xlane.xlu0 %1680
        %v1682 = vsel %vm1143, %v1678, -inf
        %1683 = vmax.xlane.f32.xlu0 %v1682
        %v1684 = vpop.xlane.xlu0 %1683
        %v1685 = vsub.f32 %v1677, %v1681
        %v1686 = vsub.f32 %v1678, %v1684
        %v1687 = vmul.f32 %v1685, 1.442695
        %v1688 = vpow.pop %v1687
        %v1689 = vmul.f32 %v1686, 1.442695
        %v1690 = vpow.pop %v1689
        %v1691 = vsel %vm1143, %v1688, 0.0
        %1692 = vadd.xlane.f32.xlu0 %v1691
        %v1693 = vpop.xlane.xlu0 %1692
        %v1694 = vsel %vm1143, %v1690, 0.0
        %1695 = vadd.xlane.f32.xlu0 %v1694
        %v1696 = vpop.xlane.xlu0 %1695
        %1697 = vrot.lane.b32.xlu0 %v1134, 104
        %v1698 = vpop.permute.xlu0 %1697
        %v1701 = vsel %vm1143, %v1688, 0
        %1703 = vmatpush.msra.mxu0 0.0
        %1704 = vmatpush.msra.mxu0 0.0
        %1705 = vmatpush.msra.mxu0 0.0
        %1706 = vmatpush.msra.mxu0 0.0
        %1707 = vmatpush.msra.mxu0 0.0
        %1708 = vmatpush.msra.mxu0 0.0
        %1709 = vmatpush.msra.mxu0 0.0
        %1710 = vmatpush.msra.mxu0 0.0
        %1711 = vmatpush.msra.mxu0 0.0
        %1712 = vmatpush.msra.mxu0 0.0
        %1713 = vmatpush.msra.mxu0 0.0
        %1714 = vmatpush.msra.mxu0 0.0
        %1715 = vmatpush.msra.mxu0 0.0
        %1716 = vmatpush.msra.mxu0 0.0
        %1717 = vmatpush.msra.mxu0 0.0
        %1718 = vmatpush.msra.mxu0 %v1698
        %1719 = vmatmul.f32.gmra.mxu0 %v1701
        %v1720 = vpop.f32.mrf.mxu0
        %v1721 = vadd.f32 0.0, %v1720
        %1722 = vdwg.mxu0
        %1723 = vrot.lane.b32.xlu0 %v1137, 104
        %v1724 = vpop.permute.xlu0 %1723
        %v1727 = vsel %vm1143, %v1690, 0
        %1729 = vmatpush.msra.mxu0 0.0
        %1730 = vmatpush.msra.mxu0 0.0
        %1731 = vmatpush.msra.mxu0 0.0
        %1732 = vmatpush.msra.mxu0 0.0
        %1733 = vmatpush.msra.mxu0 0.0
        %1734 = vmatpush.msra.mxu0 0.0
        %1735 = vmatpush.msra.mxu0 0.0
        %1736 = vmatpush.msra.mxu0 0.0
        %1737 = vmatpush.msra.mxu0 0.0
        %1738 = vmatpush.msra.mxu0 0.0
        %1739 = vmatpush.msra.mxu0 0.0
        %1740 = vmatpush.msra.mxu0 0.0
        %1741 = vmatpush.msra.mxu0 0.0
        %1742 = vmatpush.msra.mxu0 0.0
        %1743 = vmatpush.msra.mxu0 0.0
        %1744 = vmatpush.msra.mxu0 %v1724
        %1745 = vmatmul.f32.gmra.mxu0 %v1727
        %v1746 = vpop.f32.mrf.mxu0
        %v1747 = vadd.f32 0.0, %v1746
        %1748 = vdwg.mxu0
        %v1749 = vrcp.pop %v1693
        %v1750 = vrcp.pop %v1696
        %v1751 = vmul.f32 %v1721, %v1749
        %v1752 = vmul.f32 %v1747, %v1750
        %v1754 = vsel %vm1143, %v1751, 0
        %v1757 = vsel %vm1143, %v1752, 0
        %1759 = vmatpush.msra.mxu0 0.0
        %1760 = vmatpush.msra.mxu0 0.0
        %1761 = vmatpush.msra.mxu0 0.0
        %1762 = vmatpush.msra.mxu0 0.0
        %1763 = vmatpush.msra.mxu0 0.0
        %1764 = vmatpush.msra.mxu0 0.0
        %1765 = vmatpush.msra.mxu0 0.0
        %1766 = vmatpush.msra.mxu0 0.0
        %1767 = vmatpush.msra.mxu0 0.0
        %1768 = vmatpush.msra.mxu0 0.0
        %1769 = vmatpush.msra.mxu0 0.0
        %1770 = vmatpush.msra.mxu0 0.0
        %1771 = vmatpush.msra.mxu0 0.0
        %1772 = vmatpush.msra.mxu0 0.0
        %1773 = vmatpush.msra.mxu0 0.0
        %1774 = vmatpush.msra.mxu0 %v1142
        %1775 = vmatmul.f32.gmra.mxu0 %v1754
        %v1776 = vpop.f32.mrf.mxu0
        %v1777 = vadd.f32 0.0, %v1776
        %1778 = vmatmul.f32.gmra.mxu0 %v1757
        %v1779 = vpop.f32.mrf.mxu0
        %v1780 = vadd.f32 0.0, %v1779
        %1781 = vdwg.mxu0
        %v1782 = vadd.f32 %v1619, %v1777
        %v1783 = vadd.f32 %v1620, %v1780
        %v1784 = vld [vmem:[%s950] sm:$0x1]
        %v1786 = vperm.slane %v1784, 0
        %v1788 = vadd.f32 %v1782, %v1786
        %v1789 = vadd.f32 %v1783, %v1786
        %v1790 = vadd.f32 %v974, %v1788
        %v1791 = vadd.f32 %v975, %v1789
        %v1792 = vld [vmem:[%s953] sm:$0x1]
        %v1793 = vld [vmem:[%s956] sm:$0x1]
        %v1794 = vsel %vm978, %v1790, 0.0
        %1795 = vadd.xlane.f32.xlu0 %v1794
        %v1796 = vpop.xlane.xlu0 %1795
        %v1797 = vsel %vm978, %v1791, 0.0
        %1798 = vadd.xlane.f32.xlu0 %v1797
        %v1799 = vpop.xlane.xlu0 %1798
        %v1800 = vmul.f32 %v1796, %v991
        %v1801 = vmul.f32 %v1799, %v991
        %v1802 = vsub.f32 %v1790, %v1800
        %v1803 = vsub.f32 %v1791, %v1801
        %v1804 = vmul.f32 %v1802, %v1802
        %v1805 = vmul.f32 %v1803, %v1803
        %v1806 = vsel %vm978, %v1804, 0.0
        %1807 = vadd.xlane.f32.xlu0 %v1806
        %v1808 = vpop.xlane.xlu0 %1807
        %v1809 = vsel %vm978, %v1805, 0.0
        %1810 = vadd.xlane.f32.xlu0 %v1809
        %v1811 = vpop.xlane.xlu0 %1810
        %v1812 = vmul.f32 %v1808, %v991
        %v1813 = vmul.f32 %v1811, %v991
        %v1814 = vadd.f32 %v1812, 1e-05
        %v1815 = vadd.f32 %v1813, 1e-05
        %v1816 = vrsqrt.pop %v1814
        %v1817 = vmul.f32 %v1816, %v1814
        %v1818 = vmul.f32 %v1817, %v1816
        %v1819 = vmul.f32 0.5, %v1818
        %v1820 = vsub.f32 1.5, %v1819
        %v1821 = vmul.f32 %v1816, %v1820
        %vm1822 = vweird.f32 %v1814
        %vm1823 = vweird.f32 %v1816
        %vm1824 = vmor %vm1822, %vm1823
        %v1825 = vsel %vm1824, %v1816, %v1821
        %v1826 = vrsqrt.pop %v1815
        %v1827 = vmul.f32 %v1826, %v1815
        %v1828 = vmul.f32 %v1827, %v1826
        %v1829 = vmul.f32 0.5, %v1828
        %v1830 = vsub.f32 1.5, %v1829
        %v1831 = vmul.f32 %v1826, %v1830
        %vm1832 = vweird.f32 %v1815
        %vm1833 = vweird.f32 %v1826
        %vm1834 = vmor %vm1832, %vm1833
        %v1835 = vsel %vm1834, %v1826, %v1831
        %v1836 = vmul.f32 %v1802, %v1825
        %v1837 = vmul.f32 %v1803, %v1835
        %v1839 = vperm.slane %v1792, 0
        %v1841 = vmul.f32 %v1836, %v1839
        %v1842 = vmul.f32 %v1837, %v1839
        %v1844 = vperm.slane %v1793, 0
        %v1846 = vadd.f32 %v1841, %v1844
        %v1847 = vadd.f32 %v1842, %v1844
        %v1848 = vld [vmem:[%s808] sm:$0xff]
        %v1849 = vld [vmem:[%s808 + $0x8] sm:$0xff]
        %v1850 = vld [vmem:[%s808 + $0x10] sm:$0xff]
        %v1851 = vld [vmem:[%s808 + $0x18] sm:$0xff]
        %v1852 = vld [vmem:[%s817] sm:$0x1]
        %v1854 = vperm.slane %v1852, 0
        %v1857 = vsel %vm978, %v1846, 0
        %v1860 = vsel %vm978, %v1847, 0
        %1862 = vmatpush.msra.mxu0 0.0
        %1863 = vmatpush.msra.mxu0 0.0
        %1864 = vmatpush.msra.mxu0 0.0
        %1865 = vmatpush.msra.mxu0 0.0
        %1866 = vmatpush.msra.mxu0 0.0
        %1867 = vmatpush.msra.mxu0 0.0
        %1868 = vmatpush.msra.mxu0 0.0
        %1869 = vmatpush.msra.mxu0 0.0
        %1870 = vmatpush.msra.mxu0 0.0
        %1871 = vmatpush.msra.mxu0 0.0
        %1872 = vmatpush.msra.mxu0 0.0
        %1873 = vmatpush.msra.mxu0 0.0
        %1874 = vmatpush.msra.mxu0 %v1851
        %1875 = vmatpush.msra.mxu0 %v1850
        %1876 = vmatpush.msra.mxu0 %v1849
        %1877 = vmatpush.msra.mxu0 %v1848
        %1878 = vmatmul.f32.gmra.mxu0 %v1857
        %v1879 = vpop.f32.mrf.mxu0
        %v1880 = vadd.f32 %v1854, %v1879
        %1881 = vmatmul.f32.gmra.mxu0 %v1860
        %v1882 = vpop.f32.mrf.mxu0
        %v1883 = vadd.f32 %v1854, %v1882
        %1884 = vdwg.mxu0
        %v1885 = vmax.f32 %v1880, 0.0
        %v1886 = vmax.f32 %v1883, 0.0
        %v1887 = vld [vmem:[%s961] sm:$0xff]
        %v1888 = vld [vmem:[%s961 + $0x8] sm:$0xff]
        %v1889 = vld [vmem:[%s961 + $0x10] sm:$0xff]
        %v1890 = vld [vmem:[%s961 + $0x18] sm:$0xff]
        %v1891 = vld [vmem:[%s961 + $0x20] sm:$0xff]
        %v1892 = vld [vmem:[%s961 + $0x28] sm:$0xff]
        %v1893 = vld [vmem:[%s961 + $0x30] sm:$0xff]
        %v1894 = vld [vmem:[%s961 + $0x38] sm:$0xff]
        %v1895 = vld [vmem:[%s964] sm:$0x1]
        %v1897 = vperm.slane %v1895, 0
        %vm1899 = vcmask 523264
        %v1901 = vsel %vm1899, %v1885, 0
        %v1904 = vsel %vm1899, %v1886, 0
        %1906 = vmatpush.msra.mxu0 0.0
        %1907 = vmatpush.msra.mxu0 0.0
        %1908 = vmatpush.msra.mxu0 0.0
        %1909 = vmatpush.msra.mxu0 0.0
        %1910 = vmatpush.msra.mxu0 0.0
        %1911 = vmatpush.msra.mxu0 0.0
        %1912 = vmatpush.msra.mxu0 0.0
        %1913 = vmatpush.msra.mxu0 0.0
        %1914 = vmatpush.msra.mxu0 %v1894
        %1915 = vmatpush.msra.mxu0 %v1893
        %1916 = vmatpush.msra.mxu0 %v1892
        %1917 = vmatpush.msra.mxu0 %v1891
        %1918 = vmatpush.msra.mxu0 %v1890
        %1919 = vmatpush.msra.mxu0 %v1889
        %1920 = vmatpush.msra.mxu0 %v1888
        %1921 = vmatpush.msra.mxu0 %v1887
        %1922 = vmatmul.f32.gmra.mxu0 %v1901
        %v1923 = vpop.f32.mrf.mxu0
        %v1924 = vadd.f32 %v1897, %v1923
        %1925 = vmatmul.f32.gmra.mxu0 %v1904
        %v1926 = vpop.f32.mrf.mxu0
        %v1927 = vadd.f32 %v1897, %v1926
        %1928 = vdwg.mxu0
        %v1929 = vadd.f32 %v1790, %v1924
        %v1930 = vadd.f32 %v1791, %v1927
        %1931 = vst.msk [vmem:[#allocation2] sm:$0xff] %vm978, %v1929
        %1932 = vst.msk [vmem:[#allocation2 + $0x8] sm:$0xff] %vm978, %v1930
        %p1933 = scmp.eq.s32.totalorder %s41, 1
        // Predicated region
        $region129: #{tpu_custom_call.1} parent=95 // pred_check
          %p1934 = pneg %p1933
        $region130: #{tpu_custom_call.1} parent=95 // pred_check_branch
          %1936 = sbr.rel (%p1934) target = $region132
        $region131: #{tpu_custom_call.1} parent=95 // pred_region
          %v1937 = vld [vmem:[%s17] sm:$0x1]
          %v1938 = vld [vmem:[%s18] sm:$0x1]
          %v1939 = vsel %vm978, %v1929, 0.0
          %1940 = vadd.xlane.f32.xlu0 %v1939
          %v1941 = vpop.xlane.xlu0 %1940
          %v1942 = vsel %vm978, %v1930, 0.0
          %1943 = vadd.xlane.f32.xlu0 %v1942
          %v1944 = vpop.xlane.xlu0 %1943
          %v1945 = vmul.f32 %v1941, %v991
          %v1946 = vmul.f32 %v1944, %v991
          %v1947 = vsub.f32 %v1929, %v1945
          %v1948 = vsub.f32 %v1930, %v1946
          %v1949 = vmul.f32 %v1947, %v1947
          %v1950 = vmul.f32 %v1948, %v1948
          %v1951 = vsel %vm978, %v1949, 0.0
          %1952 = vadd.xlane.f32.xlu0 %v1951
          %v1953 = vpop.xlane.xlu0 %1952
          %v1954 = vsel %vm978, %v1950, 0.0
          %1955 = vadd.xlane.f32.xlu0 %v1954
          %v1956 = vpop.xlane.xlu0 %1955
          %v1957 = vmul.f32 %v1953, %v991
          %v1958 = vmul.f32 %v1956, %v991
          %v1959 = vadd.f32 %v1957, 1e-05
          %v1960 = vadd.f32 %v1958, 1e-05
          %v1961 = vrsqrt.pop %v1959
          %v1962 = vmul.f32 %v1961, %v1959
          %v1963 = vmul.f32 %v1962, %v1961
          %v1964 = vmul.f32 0.5, %v1963
          %v1965 = vsub.f32 1.5, %v1964
          %v1966 = vmul.f32 %v1961, %v1965
          %vm1967 = vweird.f32 %v1959
          %vm1968 = vweird.f32 %v1961
          %vm1969 = vmor %vm1967, %vm1968
          %v1970 = vsel %vm1969, %v1961, %v1966
          %v1971 = vrsqrt.pop %v1960
          %v1972 = vmul.f32 %v1971, %v1960
          %v1973 = vmul.f32 %v1972, %v1971
          %v1974 = vmul.f32 0.5, %v1973
          %v1975 = vsub.f32 1.5, %v1974
          %v1976 = vmul.f32 %v1971, %v1975
          %vm1977 = vweird.f32 %v1960
          %vm1978 = vweird.f32 %v1971
          %vm1979 = vmor %vm1977, %vm1978
          %v1980 = vsel %vm1979, %v1971, %v1976
          %v1981 = vmul.f32 %v1947, %v1970
          %v1982 = vmul.f32 %v1948, %v1980
          %v1984 = vperm.slane %v1937, 0
          %v1986 = vmul.f32 %v1981, %v1984
          %v1987 = vmul.f32 %v1982, %v1984
          %v1989 = vperm.slane %v1938, 0
          %v1991 = vadd.f32 %v1986, %v1989
          %v1992 = vadd.f32 %v1987, %v1989
          %1993 = vst.msk [vmem:[#allocation15] sm:$0xff] %vm978, %v1991
          %1994 = vst.msk [vmem:[#allocation15 + $0x8] sm:$0xff] %vm978, %v1992
        $region132: #{tpu_custom_call.1} parent=95 // pred_fallthru
          _
        // Predicated region
        $region133: #{tpu_custom_call.1} parent=95 // pred_check
          %p1995 = pneg %p533
        $region134: #{tpu_custom_call.1} parent=95 // pred_check_branch
          %1997 = sbr.rel (%p1995) target = $region136
        $region135: #{tpu_custom_call.1} parent=95 // pred_region
          %1999 = vsyncadd [#allocation5], 0
          %s2000 = sshll.u32 [#allocation15], 4
          %s2001 = int_to_ptr.vmem [resolvable:$true] %s2000
          %s2002 = sshll.u32 %s19, 4
          %s2003 = int_to_ptr.hbm [resolvable:$true] %s2002
          %2008 = dma.vmem_to_hbm [thread:$0]  %s2001, 256, %s2003, [#allocation5], 128, 128, 8
        $region136: #{tpu_custom_call.1} parent=95 // pred_fallthru
          _
        // Predicated region
        $region137: #{tpu_custom_call.1} parent=95 // pred_check
          %p2009 = pneg %p533
        $region138: #{tpu_custom_call.1} parent=95 // pred_check_branch
          %2011 = sbr.rel (%p2009) target = $region140
        $region139: #{tpu_custom_call.1} parent=95 // pred_region
          %2013 = dma.done [#allocation5], 256
        $region140: #{tpu_custom_call.1} parent=95 // pred_fallthru
          _
      $region96: #{tpu_custom_call.1} parent=5 // pred_fallthru
        _
      %p2014 = scmp.le.s32.totalorder 2, %s36
      // Predicated region
      $region141: #{tpu_custom_call.1} parent=5 // pred_check
        %p2015 = pneg %p2014
      $region142: #{tpu_custom_call.1} parent=5 // pred_check_branch
        %2017 = sbr.rel (%p2015) target = $region144
      $region143: #{tpu_custom_call.1} parent=5 // pred_region
        %s2018 = ssub.s32 %s36, 2
      $region144: #{tpu_custom_call.1} parent=5 // pred_fallthru
        _
    $region6: #{tpu_custom_call.1} parent=1 // loop_footer
      %s40 = sadd.s32 1, %s36
    $region7: #{tpu_custom_call.1} parent=1 // loop_footer_branch
      %35 = sbr.rel target = $region3
    $region8: #{tpu_custom_call.1} parent=1 // loop_exit
      _
    %2019 = vsyncpa [#allocation4], 1
    %s2020 = scalar_lea.sflag [#allocation4], 1
    %2021 = vsyncpa %s2020, 1
    %2022 = vsyncpa [#allocation7], 1
    %s2023 = scalar_lea.sflag [#allocation7], 1
    %2024 = vsyncpa %s2023, 1
    %2025 = vsyncpa [#allocation10], 1
    %s2026 = scalar_lea.sflag [#allocation10], 1
    %2027 = vsyncpa %s2026, 1
    %2028 = vsyncpa [#allocation13], 1
    %s2029 = scalar_lea.sflag [#allocation13], 1
    %2030 = vsyncpa %s2029, 1
    %2031 = vsyncpa [#allocation5], 1
    %s2032 = scalar_lea.sflag [#allocation5], 1
    %2033 = vsyncpa %s2032, 1

</llo_original>
